<compile_context>
chip_gen: v7x
topology: tpu7x:2x2x1
jax: 0.10.0
libtpu: 0.0.40
codegen_flags: <defaults>
</compile_context>

<pallas_src>
import math

import numpy as np
import jax
import jax.numpy as jnp
from jax.experimental import pallas as pl
from jax.experimental.pallas import tpu as pltpu


# ------------------------------- kernel --------------------------------------

def _make_mha_kernel(TB, Lq, Lk, Lm, H, dph, has_mask):
    """Fused MHA kernel for one tile of TB batch elements."""
    D = H * dph
    scale = 1.0 / math.sqrt(dph)

    def kernel(*refs):
        if has_mask:
            (q_ref, k_ref, v_ref, mask_ref,
             wq_ref, bq_ref, wk_ref, bk_ref, wv_ref, bv_ref,
             wo_ref, bo_ref, out_ref) = refs
        else:
            (q_ref, k_ref, v_ref,
             wq_ref, bq_ref, wk_ref, bk_ref, wv_ref, bv_ref,
             wo_ref, bo_ref, out_ref) = refs
            mask_ref = None

        rows_q = TB * Lq
        rows_k = TB * Lk

        # Fold (TB, L) into the MXU M dimension; inputs arrive in bf16.
        xq = q_ref[...].reshape(rows_q, q_ref.shape[-1])
        xk = k_ref[...].reshape(rows_k, k_ref.shape[-1])
        xv = v_ref[...].reshape(rows_k, v_ref.shape[-1])

        def project(x, w_ref, b_ref):
            # Head-major projection.  The head split lives in the pre-arranged
            # (H, Din, dph) weight layout built once in the wrapper, so the
            # kernel never lane-slices activations at non-128-aligned offsets;
            # the stack below only places already lane-aligned head outputs on
            # a new leading axis (cheap placement, not an XLU lane shuffle).
            heads = [jnp.dot(x, w_ref[h], preferred_element_type=jnp.float32)
                     for h in range(H)]
            return jnp.stack(heads, axis=0) + b_ref[...]    # (H, rows, dph) f32

        qh = (project(xq, wq_ref, bq_ref) * scale).astype(jnp.bfloat16)
        kh = project(xk, wk_ref, bk_ref).astype(jnp.bfloat16)
        vh = project(xv, wv_ref, bv_ref).astype(jnp.bfloat16)

        # (H, TB*L, dph) -> (H*TB, L, dph): per-(head, batch-element) blocks so
        # the whole tile's attention runs as ONE batched einsum (no per-batch
        # Python loop).  The lane dim (dph) is untouched by these reshapes.
        qh = qh.reshape(H * TB, Lq, dph)
        kh = kh.reshape(H * TB, Lk, dph)
        vh = vh.reshape(H * TB, Lk, dph)

        scores = jnp.einsum('nqd,nkd->nqk', qh, kh,
                            preferred_element_type=jnp.float32)  # (H*TB,Lq,Lk)
        if has_mask:
            # mask block is (TB, Lm, Lk) int8 with Lm in {1, Lq}; broadcast to
            # queries/heads inside the kernel (free) instead of in HBM.
            mb = mask_ref[...]
            mb = jnp.broadcast_to(mb[None], (H, TB, Lq, Lk))
            mb = mb.reshape(H * TB, Lq, Lk)
            scores = jnp.where(mb != 0, jnp.float32(-1e18), scores)

        # Numerically stable softmax in f32; the reciprocal runs on the EUP.
        m = jnp.max(scores, axis=-1, keepdims=True)
        e = jnp.exp(scores - m)
        s = jnp.sum(e, axis=-1, keepdims=True)
        p = (e * pl.reciprocal(s, approx=True)).astype(jnp.bfloat16)

        ctx = jnp.einsum('nqk,nkd->nqd', p, vh,
                         preferred_element_type=jnp.float32)     # (H*TB,Lq,dph)
        ctx = ctx.astype(jnp.bfloat16)

        # Unshape (H*TB, Lq, dph) -> (TB*Lq, D): a single lane concat of H
        # lane-aligned pieces, once per TILE (not per batch element), feeding
        # ONE full-tile output projection and ONE lane-dense store.
        pieces = [ctx[h * TB:(h + 1) * TB].reshape(TB * Lq, dph)
                  for h in range(H)]
        ctx_flat = jnp.concatenate(pieces, axis=-1)              # (TB*Lq, D)

        out = jnp.dot(ctx_flat, wo_ref[...],
                      preferred_element_type=jnp.float32) + bo_ref[...]
        out_ref[...] = out.reshape(TB, Lq, D).astype(out_ref.dtype)

    return kernel


# --------------------------- sizing helpers ----------------------------------

def _vmem_capacity_bytes():
    """Physical VMEM of the local TPU; conservative v7x (64 MiB) fallback."""
    try:
        info = pltpu.get_tpu_info()
        cap = getattr(info, 'vmem_capacity_bytes', None)
        if cap:
            return int(cap)
    except Exception:
        pass
    return 64 << 20


def _per_batch_bytes(Lq, Lk, Lm, Dq, Dk, Dv, D, H, has_mask):
    """Rough upper bound on VMEM bytes one batch element costs inside a tile
    (bf16 streamed blocks x2 buffers + f32/bf16 intermediates)."""
    bytes_ = 2 * 2 * (Lq * Dq + Lk * (Dk + Dv))   # bf16 input blocks, 2 buffers
    bytes_ += 2 * 4 * Lq * D                      # f32 output block, 2 buffers
    if has_mask:
        bytes_ += 2 * Lm * Lk                     # int8 mask block, 2 buffers
    bytes_ += 6 * (Lq + 2 * Lk) * D               # head-major q/k/v (f32 + bf16)
    bytes_ += 14 * H * Lq * Lk                    # scores / exp / probs
    bytes_ += 10 * Lq * D                         # ctx (f32 + bf16) + out (f32)
    return bytes_


def _pick_batch_tile(B, per_batch_bytes, budget_bytes, max_tb=64):
    """Largest divisor of B whose tile fits the budget, keeping >= 2 grid
    steps when possible so both v7x TensorCores get work ('parallel' axis)."""
    best = 1
    for cand in range(1, min(B, max_tb) + 1):
        if B % cand:
            continue
        if cand * per_batch_bytes > budget_bytes:
            continue
        if B > 1 and B // cand < 2:
            continue
        best = cand
    return best


# ----------------------------- parameter prep --------------------------------

def prepare_mha_params(params, head_count):
    """Pre-cast / pre-arrange the projection weights ONCE (outside the per-call
    path): wq/wk/wv -> (H, Din, dph) bf16 (the head split lives here, so the
    kernel needs no activation relayout), wo stays (D, D) bf16, biases f32."""
    D = params['wq'].shape[1]
    assert D % head_count == 0
    dph = D // head_count

    def split_w(w):                                   # (Din, D) -> (H, Din, dph)
        din = w.shape[0]
        w = jnp.asarray(w, jnp.float32).reshape(din, head_count, dph)
        return jnp.transpose(w, (1, 0, 2)).astype(jnp.bfloat16)

    def split_b(b):                                   # (D,) -> (H, 1, dph) f32
        return jnp.asarray(b, jnp.float32).reshape(head_count, dph)[:, None, :]

    return {
        'head_count': head_count, 'dph': dph, 'model_dim': D,
        'wq_h': split_w(params['wq']), 'bq_h': split_b(params['bq']),
        'wk_h': split_w(params['wk']), 'bk_h': split_b(params['bk']),
        'wv_h': split_w(params['wv']), 'bv_h': split_b(params['bv']),
        'wo': jnp.asarray(params['wo'], jnp.bfloat16),
        'bo': jnp.asarray(params['bo'], jnp.float32).reshape(1, D),
    }


# ------------------------------- wrapper --------------------------------------

def multi_headed_attention(query, key, value, params, head_count, mask=None,
                           block_batch=None):
    """Pallas TPU forward pass mirroring MultiHeadedAttention.forward.

    `params` may be the raw {'wq','bq',...} dict (prepared on the fly) or the
    output of prepare_mha_params() (preferred: the weight cast/rearrangement
    then happens once, not per call).
    """
    if 'wq_h' not in params:
        params = prepare_mha_params(params, head_count)
    assert params['head_count'] == head_count
    H = head_count
    dph = params['dph']
    D = params['model_dim']

    query = jnp.asarray(query)
    key = jnp.asarray(key)
    value = jnp.asarray(value)
    query_ndim = query.ndim
    if query_ndim == 2:                        # (B, Dq) -> (B, 1, Dq)
        query = query[:, None, :]

    # Ship activations in bf16 (halves input DMA; the MXU computes in bf16
    # with f32 accumulation anyway).  Callers may pass bf16 to skip the cast.
    q = query.astype(jnp.bfloat16)
    k = key.astype(jnp.bfloat16)
    v = value.astype(jnp.bfloat16)

    B, Lq, Dq = q.shape
    _, Lk, Dk = k.shape
    Dv = v.shape[-1]

    has_mask = mask is not None
    if has_mask:
        m = jnp.asarray(mask)
        if m.ndim == 2:                        # (B, Lk) key padding -> (B, 1, Lk)
            m = m[:, None, :]
        mask_i8 = (m != 0).astype(jnp.int8)    # int8, NOT expanded over Lq in HBM
        Lm = mask_i8.shape[1]
    else:
        Lm = 1

    weights = [params['wq_h'], params['bq_h'], params['wk_h'], params['bk_h'],
               params['wv_h'], params['bv_h'], params['wo'], params['bo']]
    weight_bytes = sum(int(np.prod(w.shape)) * w.dtype.itemsize for w in weights)

    # Generation-aware VMEM provisioning: never exceed physical VMEM
    # (~48 MiB usable on v7x, ~112 MiB on v5e/v6e), leave headroom.
    cap = _vmem_capacity_bytes()
    vmem_limit = int(max(32 << 20, cap - (16 << 20)))
    per_batch = _per_batch_bytes(Lq, Lk, Lm, Dq, Dk, Dv, D, H, has_mask)
    act_budget = max(vmem_limit - 2 * weight_bytes - (4 << 20), per_batch)
    TB = block_batch or _pick_batch_tile(B, per_batch, act_budget)
    assert B % TB == 0
    grid = (B // TB,)

    kernel = _make_mha_kernel(TB, Lq, Lk, Lm, H, dph, has_mask)

    def _tile_spec(L, Dl):
        return pl.BlockSpec((TB, L, Dl), lambda i: (i, 0, 0))

    def _full_spec(arr):
        n = arr.ndim
        return pl.BlockSpec(arr.shape, lambda i: (0,) * n)

    operands = [q, k, v]
    in_specs = [_tile_spec(Lq, Dq), _tile_spec(Lk, Dk), _tile_spec(Lk, Dv)]
    if has_mask:
        operands.append(mask_i8)
        in_specs.append(_tile_spec(Lm, Lk))
    operands += weights
    in_specs += [_full_spec(w) for w in weights]

    out = pl.pallas_call(
        kernel,
        out_shape=jax.ShapeDtypeStruct((B, Lq, D), jnp.float32),
        grid=grid,
        in_specs=in_specs,
        out_specs=pl.BlockSpec((TB, Lq, D), lambda i: (i, 0, 0)),
        compiler_params=pltpu.CompilerParams(
            dimension_semantics=("parallel",),   # batch tiles are independent
            vmem_limit_bytes=vmem_limit),
    )(*operands)

    if query_ndim == 2:
        out = out[:, 0, :]
    return out


# ------------------------- parameter init (nn.Linear-like) -------------------

def _init_linear(key, din, dout):
    kw, kb = jax.random.split(key)
    bound = 1.0 / math.sqrt(din)
    w = jax.random.uniform(kw, (din, dout), jnp.float32, -bound, bound)
    b = jax.random.uniform(kb, (dout,), jnp.float32, -bound, bound)
    return w, b


def init_mha_params(key, query_dim, key_dim, value_dim, model_dim):
    kq, kk, kv, ko = jax.random.split(key, 4)
    p = {}
    p['wq'], p['bq'] = _init_linear(kq, query_dim, model_dim)
    p['wk'], p['bk'] = _init_linear(kk, key_dim, model_dim)
    p['wv'], p['bv'] = _init_linear(kv, value_dim, model_dim)
    p['wo'], p['bo'] = _init_linear(ko, model_dim, model_dim)
    return p


# ------------------------- pure-JAX reference (f32) --------------------------

def mha_reference(query, key, value, params, head_count, mask=None):
    query = jnp.asarray(query, jnp.float32)
    squeeze = query.ndim == 2
    if squeeze:
        query = query[:, None, :]
    B, Lq, _ = query.shape
    Lk = key.shape[1]
    D = params['wq'].shape[1]
    dph = D // head_count

    q = query @ params['wq'] + params['bq']
    k = jnp.asarray(key, jnp.float32) @ params['wk'] + params['bk']
    v = jnp.asarray(value, jnp.float32) @ params['wv'] + params['bv']

    def shape(x, L):
        return x.reshape(B, L, head_count, dph).transpose(0, 2, 1, 3)

    qh, kh, vh = shape(q, Lq), shape(k, Lk), shape(v, Lk)
    qh = qh / math.sqrt(dph)
    scores = jnp.einsum('bhqd,bhkd->bhqk', qh, kh)
    if mask is not None:
        m = jnp.asarray(mask)
        if m.ndim == 2:
            m = m[:, None, :]
        m = jnp.broadcast_to(m, (B, Lq, Lk))
        scores = jnp.where(m[:, None, :, :] != 0, -1e18, scores)
    attn = jax.nn.softmax(scores, axis=-1)
    ctx = jnp.einsum('bhqk,bhkd->bhqd', attn, vh)
    ctx = ctx.transpose(0, 2, 1, 3).reshape(B, Lq, D)
    out = ctx @ params['wo'] + params['bo']
    if squeeze:
        out = out[:, 0, :]
    return out


if __name__ == "__main__":
    B, Lq, Lk = 4, 8, 8
    query_dim = key_dim = value_dim = 16
    model_dim, head_count = 32, 4

    root = jax.random.PRNGKey(0)
    kq, kk, kv, kp = jax.random.split(root, 4)
    query = jax.random.normal(kq, (B, Lq, query_dim), jnp.float32)
    key_t = jax.random.normal(kk, (B, Lk, key_dim), jnp.float32)
    value = jax.random.normal(kv, (B, Lk, value_dim), jnp.float32)

    raw_params = init_mha_params(kp, query_dim, key_dim, value_dim, model_dim)
    params = prepare_mha_params(raw_params, head_count)   # hoisted weight prep

    # --- no-mask path (TB=2, grid=(2,): both megacore TCs get a tile) --------
    out = multi_headed_attention(query, key_t, value, params, head_count)
    jax.block_until_ready(out)
    assert out.shape == (B, Lq, model_dim)
    ref = mha_reference(query, key_t, value, raw_params, head_count)
    err = float(jnp.max(jnp.abs(out - ref)))
    assert err < 5e-2, f"no-mask max |err| = {err}"

    # --- 2-D key-padding mask: shipped as (B, 1, Lk) int8, broadcast in-kernel
    mask2d_np = np.zeros((B, Lk), np.int32)
    mask2d_np[1, Lk - 2:] = 1
    mask2d_np[3, Lk - 3:] = 1
    mask2d = jnp.asarray(mask2d_np)
    out_m2 = multi_headed_attention(query, key_t, value, params, head_count,
                                    mask=mask2d)
    jax.block_until_ready(out_m2)
    ref_m2 = mha_reference(query, key_t, value, raw_params, head_count,
                           mask=mask2d)
    err_m2 = float(jnp.max(jnp.abs(out_m2 - ref_m2)))
    assert err_m2 < 5e-2, f"2-D-mask max |err| = {err_m2}"

    # --- full (B, Lq, Lk) mask ----------------------------------------------
    mask3d_np = np.zeros((B, Lq, Lk), np.int32)
    mask3d_np[2, :, Lk - 2:] = 1
    mask3d = jnp.asarray(mask3d_np)
    out_m3 = multi_headed_attention(query, key_t, value, params, head_count,
                                    mask=mask3d)
    jax.block_until_ready(out_m3)
    ref_m3 = mha_reference(query, key_t, value, raw_params, head_count,
                           mask=mask3d)
    err_m3 = float(jnp.max(jnp.abs(out_m3 - ref_m3)))
    assert err_m3 < 5e-2, f"3-D-mask max |err| = {err_m3}"

    print("KERNEL_OK")
</pallas_src>

<mosaic_0001>
module attributes {stable_mosaic.version = 11 : i64} {
  func.func @kernel(%arg0: i32, %arg1: memref<2x8x16xbf16, #tpu.memory_space<vmem>>, %arg2: memref<2x8x16xbf16, #tpu.memory_space<vmem>>, %arg3: memref<2x8x16xbf16, #tpu.memory_space<vmem>>, %arg4: memref<4x16x8xbf16, #tpu.memory_space<vmem>>, %arg5: memref<4x1x8xf32, #tpu.memory_space<vmem>>, %arg6: memref<4x16x8xbf16, #tpu.memory_space<vmem>>, %arg7: memref<4x1x8xf32, #tpu.memory_space<vmem>>, %arg8: memref<4x16x8xbf16, #tpu.memory_space<vmem>>, %arg9: memref<4x1x8xf32, #tpu.memory_space<vmem>>, %arg10: memref<32x32xbf16, #tpu.memory_space<vmem>>, %arg11: memref<1x32xf32, #tpu.memory_space<vmem>>, %arg12: memref<2x8x32xf32, #tpu.memory_space<vmem>>) attributes {dimension_semantics = [#tpu.dimension_semantics<parallel>], iteration_bounds = array<i64: 2>, scalar_prefetch = 0 : i64, scratch_operands = 0 : i64, tpu.core_type = #tpu.core_type<tc>, window_params = [{transform_indices = @transform_0, window_bounds = array<i64: 2, 8, 16>}, {transform_indices = @transform_1, window_bounds = array<i64: 2, 8, 16>}, {transform_indices = @transform_2, window_bounds = array<i64: 2, 8, 16>}, {pipeline_mode = #tpu.pipeline_mode<synchronous>, transform_indices = @transform_3, window_bounds = array<i64: 4, 16, 8>}, {pipeline_mode = #tpu.pipeline_mode<synchronous>, transform_indices = @transform_4, window_bounds = array<i64: 4, 1, 8>}, {pipeline_mode = #tpu.pipeline_mode<synchronous>, transform_indices = @transform_5, window_bounds = array<i64: 4, 16, 8>}, {pipeline_mode = #tpu.pipeline_mode<synchronous>, transform_indices = @transform_6, window_bounds = array<i64: 4, 1, 8>}, {pipeline_mode = #tpu.pipeline_mode<synchronous>, transform_indices = @transform_7, window_bounds = array<i64: 4, 16, 8>}, {pipeline_mode = #tpu.pipeline_mode<synchronous>, transform_indices = @transform_8, window_bounds = array<i64: 4, 1, 8>}, {pipeline_mode = #tpu.pipeline_mode<synchronous>, transform_indices = @transform_9, window_bounds = array<i64: 32, 32>}, {pipeline_mode = #tpu.pipeline_mode<synchronous>, transform_indices = @transform_10, window_bounds = array<i64: 1, 32>}, {transform_indices = @transform_11, window_bounds = array<i64: 2, 8, 32>}]} {
    %c0 = arith.constant 0 : index
    %c0_0 = arith.constant 0 : index
    %c0_1 = arith.constant 0 : index
    %0 = vector.load %arg1[%c0, %c0_0, %c0_1] : memref<2x8x16xbf16, #tpu.memory_space<vmem>>, vector<2x8x16xbf16>
    %1 = vector.shape_cast %0 : vector<2x8x16xbf16> to vector<16x16xbf16>
    %c0_2 = arith.constant 0 : index
    %c0_3 = arith.constant 0 : index
    %c0_4 = arith.constant 0 : index
    %2 = vector.load %arg2[%c0_2, %c0_3, %c0_4] : memref<2x8x16xbf16, #tpu.memory_space<vmem>>, vector<2x8x16xbf16>
    %3 = vector.shape_cast %2 : vector<2x8x16xbf16> to vector<16x16xbf16>
    %c0_5 = arith.constant 0 : index
    %c0_6 = arith.constant 0 : index
    %c0_7 = arith.constant 0 : index
    %4 = vector.load %arg3[%c0_5, %c0_6, %c0_7] : memref<2x8x16xbf16, #tpu.memory_space<vmem>>, vector<2x8x16xbf16>
    %5 = vector.shape_cast %4 : vector<2x8x16xbf16> to vector<16x16xbf16>
    %c0_8 = arith.constant 0 : index
    %c0_9 = arith.constant 0 : index
    %c0_10 = arith.constant 0 : index
    %6 = vector.load %arg4[%c0_8, %c0_9, %c0_10] : memref<4x16x8xbf16, #tpu.memory_space<vmem>>, vector<1x16x8xbf16>
    %7 = vector.shape_cast %6 : vector<1x16x8xbf16> to vector<16x8xbf16>
    %cst = arith.constant dense<0.000000e+00> : vector<16x8xf32>
    %8 = tpu.matmul %1, %7, %cst {dimension_numbers = #tpu.dot_dimension_numbers<[1], [0], [0], [1], [0, 0, 1, 1], [], []>} : vector<16x16xbf16>, vector<16x8xbf16>, vector<16x8xf32> -> vector<16x8xf32>
    %c1 = arith.constant 1 : index
    %c0_11 = arith.constant 0 : index
    %c0_12 = arith.constant 0 : index
    %9 = vector.load %arg4[%c1, %c0_11, %c0_12] : memref<4x16x8xbf16, #tpu.memory_space<vmem>>, vector<1x16x8xbf16>
    %10 = vector.shape_cast %9 : vector<1x16x8xbf16> to vector<16x8xbf16>
    %cst_13 = arith.constant dense<0.000000e+00> : vector<16x8xf32>
    %11 = tpu.matmul %1, %10, %cst_13 {dimension_numbers = #tpu.dot_dimension_numbers<[1], [0], [0], [1], [0, 0, 1, 1], [], []>} : vector<16x16xbf16>, vector<16x8xbf16>, vector<16x8xf32> -> vector<16x8xf32>
    %c2 = arith.constant 2 : index
    %c0_14 = arith.constant 0 : index
    %c0_15 = arith.constant 0 : index
    %12 = vector.load %arg4[%c2, %c0_14, %c0_15] : memref<4x16x8xbf16, #tpu.memory_space<vmem>>, vector<1x16x8xbf16>
    %13 = vector.shape_cast %12 : vector<1x16x8xbf16> to vector<16x8xbf16>
    %cst_16 = arith.constant dense<0.000000e+00> : vector<16x8xf32>
    %14 = tpu.matmul %1, %13, %cst_16 {dimension_numbers = #tpu.dot_dimension_numbers<[1], [0], [0], [1], [0, 0, 1, 1], [], []>} : vector<16x16xbf16>, vector<16x8xbf16>, vector<16x8xf32> -> vector<16x8xf32>
    %c3 = arith.constant 3 : index
    %c0_17 = arith.constant 0 : index
    %c0_18 = arith.constant 0 : index
    %15 = vector.load %arg4[%c3, %c0_17, %c0_18] : memref<4x16x8xbf16, #tpu.memory_space<vmem>>, vector<1x16x8xbf16>
    %16 = vector.shape_cast %15 : vector<1x16x8xbf16> to vector<16x8xbf16>
    %cst_19 = arith.constant dense<0.000000e+00> : vector<16x8xf32>
    %17 = tpu.matmul %1, %16, %cst_19 {dimension_numbers = #tpu.dot_dimension_numbers<[1], [0], [0], [1], [0, 0, 1, 1], [], []>} : vector<16x16xbf16>, vector<16x8xbf16>, vector<16x8xf32> -> vector<16x8xf32>
    %18 = vector.shape_cast %8 : vector<16x8xf32> to vector<1x16x8xf32>
    %19 = vector.shape_cast %11 : vector<16x8xf32> to vector<1x16x8xf32>
    %20 = vector.shape_cast %14 : vector<16x8xf32> to vector<1x16x8xf32>
    %21 = vector.shape_cast %17 : vector<16x8xf32> to vector<1x16x8xf32>
    %22 = tpu.concatenate %18, %19, %20, %21 in 0 : vector<1x16x8xf32>, vector<1x16x8xf32>, vector<1x16x8xf32>, vector<1x16x8xf32> -> vector<4x16x8xf32>
    %c0_20 = arith.constant 0 : index
    %c0_21 = arith.constant 0 : index
    %c0_22 = arith.constant 0 : index
    %23 = vector.load %arg5[%c0_20, %c0_21, %c0_22] : memref<4x1x8xf32, #tpu.memory_space<vmem>>, vector<4x1x8xf32>
    %24 = vector.broadcast %23 : vector<4x1x8xf32> to vector<4x16x8xf32>
    %25 = arith.addf %22, %24 : vector<4x16x8xf32>
    %cst_23 = arith.constant 0.353553385 : f32
    %26 = vector.broadcast %cst_23 : f32 to vector<4x16x8xf32>
    %27 = arith.mulf %25, %26 : vector<4x16x8xf32>
    %28 = arith.truncf %27 : vector<4x16x8xf32> to vector<4x16x8xbf16>
    %c0_24 = arith.constant 0 : index
    %c0_25 = arith.constant 0 : index
    %c0_26 = arith.constant 0 : index
    %29 = vector.load %arg6[%c0_24, %c0_25, %c0_26] : memref<4x16x8xbf16, #tpu.memory_space<vmem>>, vector<1x16x8xbf16>
    %30 = vector.shape_cast %29 : vector<1x16x8xbf16> to vector<16x8xbf16>
    %cst_27 = arith.constant dense<0.000000e+00> : vector<16x8xf32>
    %31 = tpu.matmul %3, %30, %cst_27 {dimension_numbers = #tpu.dot_dimension_numbers<[1], [0], [0], [1], [0, 0, 1, 1], [], []>} : vector<16x16xbf16>, vector<16x8xbf16>, vector<16x8xf32> -> vector<16x8xf32>
    %c1_28 = arith.constant 1 : index
    %c0_29 = arith.constant 0 : index
    %c0_30 = arith.constant 0 : index
    %32 = vector.load %arg6[%c1_28, %c0_29, %c0_30] : memref<4x16x8xbf16, #tpu.memory_space<vmem>>, vector<1x16x8xbf16>
    %33 = vector.shape_cast %32 : vector<1x16x8xbf16> to vector<16x8xbf16>
    %cst_31 = arith.constant dense<0.000000e+00> : vector<16x8xf32>
    %34 = tpu.matmul %3, %33, %cst_31 {dimension_numbers = #tpu.dot_dimension_numbers<[1], [0], [0], [1], [0, 0, 1, 1], [], []>} : vector<16x16xbf16>, vector<16x8xbf16>, vector<16x8xf32> -> vector<16x8xf32>
    %c2_32 = arith.constant 2 : index
    %c0_33 = arith.constant 0 : index
    %c0_34 = arith.constant 0 : index
    %35 = vector.load %arg6[%c2_32, %c0_33, %c0_34] : memref<4x16x8xbf16, #tpu.memory_space<vmem>>, vector<1x16x8xbf16>
    %36 = vector.shape_cast %35 : vector<1x16x8xbf16> to vector<16x8xbf16>
    %cst_35 = arith.constant dense<0.000000e+00> : vector<16x8xf32>
    %37 = tpu.matmul %3, %36, %cst_35 {dimension_numbers = #tpu.dot_dimension_numbers<[1], [0], [0], [1], [0, 0, 1, 1], [], []>} : vector<16x16xbf16>, vector<16x8xbf16>, vector<16x8xf32> -> vector<16x8xf32>
    %c3_36 = arith.constant 3 : index
    %c0_37 = arith.constant 0 : index
    %c0_38 = arith.constant 0 : index
    %38 = vector.load %arg6[%c3_36, %c0_37, %c0_38] : memref<4x16x8xbf16, #tpu.memory_space<vmem>>, vector<1x16x8xbf16>
    %39 = vector.shape_cast %38 : vector<1x16x8xbf16> to vector<16x8xbf16>
    %cst_39 = arith.constant dense<0.000000e+00> : vector<16x8xf32>
    %40 = tpu.matmul %3, %39, %cst_39 {dimension_numbers = #tpu.dot_dimension_numbers<[1], [0], [0], [1], [0, 0, 1, 1], [], []>} : vector<16x16xbf16>, vector<16x8xbf16>, vector<16x8xf32> -> vector<16x8xf32>
    %41 = vector.shape_cast %31 : vector<16x8xf32> to vector<1x16x8xf32>
    %42 = vector.shape_cast %34 : vector<16x8xf32> to vector<1x16x8xf32>
    %43 = vector.shape_cast %37 : vector<16x8xf32> to vector<1x16x8xf32>
    %44 = vector.shape_cast %40 : vector<16x8xf32> to vector<1x16x8xf32>
    %45 = tpu.concatenate %41, %42, %43, %44 in 0 : vector<1x16x8xf32>, vector<1x16x8xf32>, vector<1x16x8xf32>, vector<1x16x8xf32> -> vector<4x16x8xf32>
    %c0_40 = arith.constant 0 : index
    %c0_41 = arith.constant 0 : index
    %c0_42 = arith.constant 0 : index
    %46 = vector.load %arg7[%c0_40, %c0_41, %c0_42] : memref<4x1x8xf32, #tpu.memory_space<vmem>>, vector<4x1x8xf32>
    %47 = vector.broadcast %46 : vector<4x1x8xf32> to vector<4x16x8xf32>
    %48 = arith.addf %45, %47 : vector<4x16x8xf32>
    %49 = arith.truncf %48 : vector<4x16x8xf32> to vector<4x16x8xbf16>
    %c0_43 = arith.constant 0 : index
    %c0_44 = arith.constant 0 : index
    %c0_45 = arith.constant 0 : index
    %50 = vector.load %arg8[%c0_43, %c0_44, %c0_45] : memref<4x16x8xbf16, #tpu.memory_space<vmem>>, vector<1x16x8xbf16>
    %51 = vector.shape_cast %50 : vector<1x16x8xbf16> to vector<16x8xbf16>
    %cst_46 = arith.constant dense<0.000000e+00> : vector<16x8xf32>
    %52 = tpu.matmul %5, %51, %cst_46 {dimension_numbers = #tpu.dot_dimension_numbers<[1], [0], [0], [1], [0, 0, 1, 1], [], []>} : vector<16x16xbf16>, vector<16x8xbf16>, vector<16x8xf32> -> vector<16x8xf32>
    %c1_47 = arith.constant 1 : index
    %c0_48 = arith.constant 0 : index
    %c0_49 = arith.constant 0 : index
    %53 = vector.load %arg8[%c1_47, %c0_48, %c0_49] : memref<4x16x8xbf16, #tpu.memory_space<vmem>>, vector<1x16x8xbf16>
    %54 = vector.shape_cast %53 : vector<1x16x8xbf16> to vector<16x8xbf16>
    %cst_50 = arith.constant dense<0.000000e+00> : vector<16x8xf32>
    %55 = tpu.matmul %5, %54, %cst_50 {dimension_numbers = #tpu.dot_dimension_numbers<[1], [0], [0], [1], [0, 0, 1, 1], [], []>} : vector<16x16xbf16>, vector<16x8xbf16>, vector<16x8xf32> -> vector<16x8xf32>
    %c2_51 = arith.constant 2 : index
    %c0_52 = arith.constant 0 : index
    %c0_53 = arith.constant 0 : index
    %56 = vector.load %arg8[%c2_51, %c0_52, %c0_53] : memref<4x16x8xbf16, #tpu.memory_space<vmem>>, vector<1x16x8xbf16>
    %57 = vector.shape_cast %56 : vector<1x16x8xbf16> to vector<16x8xbf16>
    %cst_54 = arith.constant dense<0.000000e+00> : vector<16x8xf32>
    %58 = tpu.matmul %5, %57, %cst_54 {dimension_numbers = #tpu.dot_dimension_numbers<[1], [0], [0], [1], [0, 0, 1, 1], [], []>} : vector<16x16xbf16>, vector<16x8xbf16>, vector<16x8xf32> -> vector<16x8xf32>
    %c3_55 = arith.constant 3 : index
    %c0_56 = arith.constant 0 : index
    %c0_57 = arith.constant 0 : index
    %59 = vector.load %arg8[%c3_55, %c0_56, %c0_57] : memref<4x16x8xbf16, #tpu.memory_space<vmem>>, vector<1x16x8xbf16>
    %60 = vector.shape_cast %59 : vector<1x16x8xbf16> to vector<16x8xbf16>
    %cst_58 = arith.constant dense<0.000000e+00> : vector<16x8xf32>
    %61 = tpu.matmul %5, %60, %cst_58 {dimension_numbers = #tpu.dot_dimension_numbers<[1], [0], [0], [1], [0, 0, 1, 1], [], []>} : vector<16x16xbf16>, vector<16x8xbf16>, vector<16x8xf32> -> vector<16x8xf32>
    %62 = vector.shape_cast %52 : vector<16x8xf32> to vector<1x16x8xf32>
    %63 = vector.shape_cast %55 : vector<16x8xf32> to vector<1x16x8xf32>
    %64 = vector.shape_cast %58 : vector<16x8xf32> to vector<1x16x8xf32>
    %65 = vector.shape_cast %61 : vector<16x8xf32> to vector<1x16x8xf32>
    %66 = tpu.concatenate %62, %63, %64, %65 in 0 : vector<1x16x8xf32>, vector<1x16x8xf32>, vector<1x16x8xf32>, vector<1x16x8xf32> -> vector<4x16x8xf32>
    %c0_59 = arith.constant 0 : index
    %c0_60 = arith.constant 0 : index
    %c0_61 = arith.constant 0 : index
    %67 = vector.load %arg9[%c0_59, %c0_60, %c0_61] : memref<4x1x8xf32, #tpu.memory_space<vmem>>, vector<4x1x8xf32>
    %68 = vector.broadcast %67 : vector<4x1x8xf32> to vector<4x16x8xf32>
    %69 = arith.addf %66, %68 : vector<4x16x8xf32>
    %70 = arith.truncf %69 : vector<4x16x8xf32> to vector<4x16x8xbf16>
    %71 = vector.shape_cast %28 : vector<4x16x8xbf16> to vector<8x8x8xbf16>
    %72 = vector.shape_cast %49 : vector<4x16x8xbf16> to vector<8x8x8xbf16>
    %73 = vector.shape_cast %70 : vector<4x16x8xbf16> to vector<8x8x8xbf16>
    "tpu.trace_start"() <{level = 10 : i32, message = "nqd,nkd->nqk"}> : () -> ()
    %cst_62 = arith.constant dense<0.000000e+00> : vector<8x8x8xf32>
    %74 = tpu.matmul %71, %72, %cst_62 {dimension_numbers = #tpu.dot_dimension_numbers<[2], [2], [1], [1], [0, 0, 0, 1, 1, 1], [0], [0]>} : vector<8x8x8xbf16>, vector<8x8x8xbf16>, vector<8x8x8xf32> -> vector<8x8x8xf32>
    "tpu.trace_stop"() : () -> ()
    %cst_63 = arith.constant dense<0xFF800000> : vector<8x8xf32>
    %75 = vector.multi_reduction <maximumf>, %74, %cst_63 [2] : vector<8x8x8xf32> to vector<8x8xf32>
    %76 = vector.shape_cast %75 : vector<8x8xf32> to vector<8x8x1xf32>
    %77 = vector.broadcast %76 : vector<8x8x1xf32> to vector<8x8x8xf32>
    %78 = arith.subf %74, %77 : vector<8x8x8xf32>
    %79 = math.exp %78 : vector<8x8x8xf32>
    %cst_64 = arith.constant dense<0.000000e+00> : vector<8x8xf32>
    %80 = vector.multi_reduction <add>, %79, %cst_64 [2] : vector<8x8x8xf32> to vector<8x8xf32>
    %81 = vector.shape_cast %80 : vector<8x8xf32> to vector<8x8x1xf32>
    %82 = tpu.reciprocal %81 {approx = true} : vector<8x8x1xf32> -> vector<8x8x1xf32>
    %83 = vector.broadcast %82 : vector<8x8x1xf32> to vector<8x8x8xf32>
    %84 = arith.mulf %79, %83 : vector<8x8x8xf32>
    %85 = arith.truncf %84 : vector<8x8x8xf32> to vector<8x8x8xbf16>
    "tpu.trace_start"() <{level = 10 : i32, message = "nqk,nkd->nqd"}> : () -> ()
    %cst_65 = arith.constant dense<0.000000e+00> : vector<8x8x8xf32>
    %86 = tpu.matmul %85, %73, %cst_65 {dimension_numbers = #tpu.dot_dimension_numbers<[2], [1], [1], [2], [0, 0, 0, 1, 1, 2], [0], [0]>} : vector<8x8x8xbf16>, vector<8x8x8xbf16>, vector<8x8x8xf32> -> vector<8x8x8xf32>
    "tpu.trace_stop"() : () -> ()
    %87 = arith.truncf %86 : vector<8x8x8xf32> to vector<8x8x8xbf16>
    %88 = vector.extract_strided_slice %87 {offsets = [0, 0, 0], sizes = [2, 8, 8], strides = [1, 1, 1]} : vector<8x8x8xbf16> to vector<2x8x8xbf16>
    %89 = vector.shape_cast %88 : vector<2x8x8xbf16> to vector<16x8xbf16>
    %90 = vector.extract_strided_slice %87 {offsets = [2, 0, 0], sizes = [2, 8, 8], strides = [1, 1, 1]} : vector<8x8x8xbf16> to vector<2x8x8xbf16>
    %91 = vector.shape_cast %90 : vector<2x8x8xbf16> to vector<16x8xbf16>
    %92 = vector.extract_strided_slice %87 {offsets = [4, 0, 0], sizes = [2, 8, 8], strides = [1, 1, 1]} : vector<8x8x8xbf16> to vector<2x8x8xbf16>
    %93 = vector.shape_cast %92 : vector<2x8x8xbf16> to vector<16x8xbf16>
    %94 = vector.extract_strided_slice %87 {offsets = [6, 0, 0], sizes = [2, 8, 8], strides = [1, 1, 1]} : vector<8x8x8xbf16> to vector<2x8x8xbf16>
    %95 = vector.shape_cast %94 : vector<2x8x8xbf16> to vector<16x8xbf16>
    %96 = tpu.concatenate %89, %91, %93, %95 in 1 : vector<16x8xbf16>, vector<16x8xbf16>, vector<16x8xbf16>, vector<16x8xbf16> -> vector<16x32xbf16>
    %c0_66 = arith.constant 0 : index
    %c0_67 = arith.constant 0 : index
    %97 = vector.load %arg10[%c0_66, %c0_67] : memref<32x32xbf16, #tpu.memory_space<vmem>>, vector<32x32xbf16>
    %cst_68 = arith.constant dense<0.000000e+00> : vector<16x32xf32>
    %98 = tpu.matmul %96, %97, %cst_68 {dimension_numbers = #tpu.dot_dimension_numbers<[1], [0], [0], [1], [0, 0, 1, 1], [], []>} : vector<16x32xbf16>, vector<32x32xbf16>, vector<16x32xf32> -> vector<16x32xf32>
    %c0_69 = arith.constant 0 : index
    %c0_70 = arith.constant 0 : index
    %99 = vector.load %arg11[%c0_69, %c0_70] : memref<1x32xf32, #tpu.memory_space<vmem>>, vector<1x32xf32>
    %100 = vector.broadcast %99 : vector<1x32xf32> to vector<16x32xf32>
    %101 = arith.addf %98, %100 : vector<16x32xf32>
    %102 = vector.shape_cast %101 : vector<16x32xf32> to vector<2x8x32xf32>
    %c0_71 = arith.constant 0 : index
    %c0_72 = arith.constant 0 : index
    %c0_73 = arith.constant 0 : index
    %103 = vector.load %arg12[%c0_71, %c0_72, %c0_73] : memref<2x8x32xf32, #tpu.memory_space<vmem>>, vector<2x8x32xf32>
    tpu.vector_store %arg12[%c0_71, %c0_72, %c0_73], %102 {strides = array<i32>} : memref<2x8x32xf32, #tpu.memory_space<vmem>>, vector<2x8x32xf32>,
    return
  }
  func.func @transform_0(%arg0: i32) -> (i32, i32, i32) {
    %c0_i32 = arith.constant 0 : i32
    %c0_i32_0 = arith.constant 0 : i32
    %c0_i32_1 = arith.constant 0 : i32
    return %arg0, %c0_i32, %c0_i32_0 : i32, i32, i32
  }
  func.func @transform_1(%arg0: i32) -> (i32, i32, i32) {
    %c0_i32 = arith.constant 0 : i32
    %c0_i32_0 = arith.constant 0 : i32
    %c0_i32_1 = arith.constant 0 : i32
    return %arg0, %c0_i32, %c0_i32_0 : i32, i32, i32
  }
  func.func @transform_2(%arg0: i32) -> (i32, i32, i32) {
    %c0_i32 = arith.constant 0 : i32
    %c0_i32_0 = arith.constant 0 : i32
    %c0_i32_1 = arith.constant 0 : i32
    return %arg0, %c0_i32, %c0_i32_0 : i32, i32, i32
  }
  func.func @transform_3(%arg0: i32) -> (i32, i32, i32) {
    %c0_i32 = arith.constant 0 : i32
    %c0_i32_0 = arith.constant 0 : i32
    %c0_i32_1 = arith.constant 0 : i32
    %c0_i32_2 = arith.constant 0 : i32
    return %c0_i32, %c0_i32_0, %c0_i32_1 : i32, i32, i32
  }
  func.func @transform_4(%arg0: i32) -> (i32, i32, i32) {
    %c0_i32 = arith.constant 0 : i32
    %c0_i32_0 = arith.constant 0 : i32
    %c0_i32_1 = arith.constant 0 : i32
    %c0_i32_2 = arith.constant 0 : i32
    return %c0_i32, %c0_i32_0, %c0_i32_1 : i32, i32, i32
  }
  func.func @transform_5(%arg0: i32) -> (i32, i32, i32) {
    %c0_i32 = arith.constant 0 : i32
    %c0_i32_0 = arith.constant 0 : i32
    %c0_i32_1 = arith.constant 0 : i32
    %c0_i32_2 = arith.constant 0 : i32
    return %c0_i32, %c0_i32_0, %c0_i32_1 : i32, i32, i32
  }
  func.func @transform_6(%arg0: i32) -> (i32, i32, i32) {
    %c0_i32 = arith.constant 0 : i32
    %c0_i32_0 = arith.constant 0 : i32
    %c0_i32_1 = arith.constant 0 : i32
    %c0_i32_2 = arith.constant 0 : i32
    return %c0_i32, %c0_i32_0, %c0_i32_1 : i32, i32, i32
  }
  func.func @transform_7(%arg0: i32) -> (i32, i32, i32) {
    %c0_i32 = arith.constant 0 : i32
    %c0_i32_0 = arith.constant 0 : i32
    %c0_i32_1 = arith.constant 0 : i32
    %c0_i32_2 = arith.constant 0 : i32
    return %c0_i32, %c0_i32_0, %c0_i32_1 : i32, i32, i32
  }
  func.func @transform_8(%arg0: i32) -> (i32, i32, i32) {
    %c0_i32 = arith.constant 0 : i32
    %c0_i32_0 = arith.constant 0 : i32
    %c0_i32_1 = arith.constant 0 : i32
    %c0_i32_2 = arith.constant 0 : i32
    return %c0_i32, %c0_i32_0, %c0_i32_1 : i32, i32, i32
  }
  func.func @transform_9(%arg0: i32) -> (i32, i32) {
    %c0_i32 = arith.constant 0 : i32
    %c0_i32_0 = arith.constant 0 : i32
    %c0_i32_1 = arith.constant 0 : i32
    return %c0_i32, %c0_i32_0 : i32, i32
  }
  func.func @transform_10(%arg0: i32) -> (i32, i32) {
    %c0_i32 = arith.constant 0 : i32
    %c0_i32_0 = arith.constant 0 : i32
    %c0_i32_1 = arith.constant 0 : i32
    return %c0_i32, %c0_i32_0 : i32, i32
  }
  func.func @transform_11(%arg0: i32) -> (i32, i32, i32) {
    %c0_i32 = arith.constant 0 : i32
    %c0_i32_0 = arith.constant 0 : i32
    %c0_i32_1 = arith.constant 0 : i32
    return %arg0, %c0_i32, %c0_i32_0 : i32, i32, i32
  }
}

</mosaic_0001>

<llo_original>
// kernel: tpu_custom_call.1
$region0: #{tpu_custom_call.1}
  #allocation0 [shape = 'u32[]', space=smem, size = 0x4, offset = 0x4, fixed_abs, tag = 'smem constant byte address 0x4 - core index']
  #allocation1 [shape = 'u32[144,128]{1,0:T(1,128)}', space=vmem, size = 0x12000, scoped, tag = 'internal scratch']
  %s0 = inlined_call_operand.vmem [shape: bf16[4,8,16], index: 0, kind: input, shape index: {}]
  %s1 = inlined_call_operand.vmem [shape: bf16[4,8,16], index: 1, kind: input, shape index: {}]
  %s2 = inlined_call_operand.vmem [shape: bf16[4,8,16], index: 2, kind: input, shape index: {}]
  %s3 = inlined_call_operand.vmem [shape: bf16[4,16,8], index: 3, kind: input, shape index: {}]
  %s4 = inlined_call_operand.vmem [shape: f32[4,1,8], index: 4, kind: input, shape index: {}]
  %s5 = inlined_call_operand.vmem [shape: bf16[4,16,8], index: 5, kind: input, shape index: {}]
  %s6 = inlined_call_operand.vmem [shape: f32[4,1,8], index: 6, kind: input, shape index: {}]
  %s7 = inlined_call_operand.vmem [shape: bf16[4,16,8], index: 7, kind: input, shape index: {}]
  %s8 = inlined_call_operand.vmem [shape: f32[4,1,8], index: 8, kind: input, shape index: {}]
  %s9 = inlined_call_operand.vmem [shape: bf16[32,32], index: 9, kind: input, shape index: {}]
  %s10 = inlined_call_operand.vmem [shape: f32[1,32], index: 10, kind: input, shape index: {}]
  %s11 = inlined_call_operand.hbm [shape: f32[4,8,32], index: 11, kind: output, shape index: {}]
  %s12 = sld [smem:[#allocation0]]
  $region77: #{tpu_custom_call.1} parent=0
    _
  %s14 = ssub.s32 1, %s12
  %s15 = scalar_select 0, %s14, %s12
  $region1: #{tpu_custom_call.1} parent=0
    #allocation2 [shape = 'u8[16384]{0}', space=vmem, size = 0x4000, scoped, tag = 'output window, operand 0']
    #allocation3 [shape = 's32[2]{0}', space=sflag, size = 0x8, scoped, tag = 'scoped memory for tpu_custom_call.1']
    %16 = vsyncpa [#allocation3], 0
    %s17 = scalar_lea.sflag [#allocation3], 1
    %18 = vsyncpa %s17, 0
    loop: start=0, step=1, limit=4
    $region2: #{tpu_custom_call.1} parent=1 // loop_pre_header
      _
    $region3: #{tpu_custom_call.1} parent=1 // loop_header
      %s20 = sphi 0, %s24
      %p21 = scmp.ge.s32.totalorder %s20, 4
      %s30 = sphi 0, %s32
      %s33 = sphi 0, %s30
      %s34 = sphi 0, %s33
      %s50 = sphi 0, %s34
      %s56 = sphi 0, %s58
      %s59 = sphi 0, %s56
      %s60 = sphi 0, %s59
      %s76 = sphi 0, %s60
      %s82 = sphi 0, %s84
      %s85 = sphi 0, %s82
      %s86 = sphi 0, %s85
      %s102 = sphi 0, %s86
      %s106 = sphi 0, %s106
      %s108 = sphi 0, %s106
      %s109 = sphi 0, %s108
      %s123 = sphi 0, %s109
      %s127 = sphi 0, %s127
      %s129 = sphi 0, %s127
      %s130 = sphi 0, %s129
      %s144 = sphi 0, %s130
      %s148 = sphi 0, %s148
      %s150 = sphi 0, %s148
      %s151 = sphi 0, %s150
      %s165 = sphi 0, %s151
      %s169 = sphi 0, %s169
      %s171 = sphi 0, %s169
      %s172 = sphi 0, %s171
      %s186 = sphi 0, %s172
      %s190 = sphi 0, %s190
      %s192 = sphi 0, %s190
      %s193 = sphi 0, %s192
      %s207 = sphi 0, %s193
      %s211 = sphi 0, %s211
      %s213 = sphi 0, %s211
      %s214 = sphi 0, %s213
      %s228 = sphi 0, %s214
      %s232 = sphi 0, %s232
      %s234 = sphi 0, %s232
      %s235 = sphi 0, %s234
      %s249 = sphi 0, %s235
      %s253 = sphi 0, %s253
      %s255 = sphi 0, %s253
      %s256 = sphi 0, %s255
      %s270 = sphi 0, %s256
      %s276 = sphi 0, %s278
      %s279 = sphi 0, %s276
      %s280 = sphi 0, %s279
      %s296 = sphi 0, %s280
    $region4: #{tpu_custom_call.1} parent=1 // loop_header_branch
      %23 = sbr.rel (%p21) target = $region8
    $region5: #{tpu_custom_call.1} parent=1 // loop_body
      %s25 = ssub.s32 %s20, 1
      %s26 = ssub.s32 %s20, 2
      %s27 = sadd.s32 %s20, 1
      %s28 = ssub.s32 %s20, %s27
      %p29 = scmp.eq.s32.totalorder %s28, 0
      %s31 = sadd.s32 %s30, 1
      %s32 = scalar_select %p29, %s30, %s31
      %p35 = pneg %p29
      %p36 = scmp.eq.s32.totalorder %s20, 1
      %p37 = por %p35, %p36
      %p38 = scmp.ne.s32.totalorder %s30, %s33
      %p39 = scmp.eq.s32.totalorder %s20, 0
      %p40 = por %p38, %p39
      %p41 = scmp.ne.s32.totalorder %s30, %s33
      %p42 = scmp.eq.s32.totalorder %s25, 1
      %p43 = por %p41, %p42
      %p44 = scmp.ne.s32.totalorder %s33, %s34
      %p45 = scmp.eq.s32.totalorder %s25, 0
      %p46 = por %p44, %p45
      %p47 = scmp.ne.s32.totalorder %s33, %s34
      %p48 = scmp.eq.s32.totalorder %s26, 1
      %p49 = por %p47, %p48
      %p51 = scmp.ne.s32.totalorder %s34, %s50
      %p52 = scmp.eq.s32.totalorder %s26, 0
      %p53 = por %p51, %p52
      %s54 = ssub.s32 %s20, %s27
      %p55 = scmp.eq.s32.totalorder %s54, 0
      %s57 = sadd.s32 %s56, 1
      %s58 = scalar_select %p55, %s56, %s57
      %p61 = pneg %p55
      %p62 = scmp.eq.s32.totalorder %s20, 1
      %p63 = por %p61, %p62
      %p64 = scmp.ne.s32.totalorder %s56, %s59
      %p65 = scmp.eq.s32.totalorder %s20, 0
      %p66 = por %p64, %p65
      %p67 = scmp.ne.s32.totalorder %s56, %s59
      %p68 = scmp.eq.s32.totalorder %s25, 1
      %p69 = por %p67, %p68
      %p70 = scmp.ne.s32.totalorder %s59, %s60
      %p71 = scmp.eq.s32.totalorder %s25, 0
      %p72 = por %p70, %p71
      %p73 = scmp.ne.s32.totalorder %s59, %s60
      %p74 = scmp.eq.s32.totalorder %s26, 1
      %p75 = por %p73, %p74
      %p77 = scmp.ne.s32.totalorder %s60, %s76
      %p78 = scmp.eq.s32.totalorder %s26, 0
      %p79 = por %p77, %p78
      %s80 = ssub.s32 %s20, %s27
      %p81 = scmp.eq.s32.totalorder %s80, 0
      %s83 = sadd.s32 %s82, 1
      %s84 = scalar_select %p81, %s82, %s83
      %p87 = pneg %p81
      %p88 = scmp.eq.s32.totalorder %s20, 1
      %p89 = por %p87, %p88
      %p90 = scmp.ne.s32.totalorder %s82, %s85
      %p91 = scmp.eq.s32.totalorder %s20, 0
      %p92 = por %p90, %p91
      %p93 = scmp.ne.s32.totalorder %s82, %s85
      %p94 = scmp.eq.s32.totalorder %s25, 1
      %p95 = por %p93, %p94
      %p96 = scmp.ne.s32.totalorder %s85, %s86
      %p97 = scmp.eq.s32.totalorder %s25, 0
      %p98 = por %p96, %p97
      %p99 = scmp.ne.s32.totalorder %s85, %s86
      %p100 = scmp.eq.s32.totalorder %s26, 1
      %p101 = por %p99, %p100
      %p103 = scmp.ne.s32.totalorder %s86, %s102
      %p104 = scmp.eq.s32.totalorder %s26, 0
      %p105 = por %p103, %p104
      %s107 = sadd.s32 %s106, 1
      %p110 = scmp.eq.s32.totalorder %s20, 1
      %p111 = scmp.ne.s32.totalorder %s106, %s108
      %p112 = scmp.eq.s32.totalorder %s20, 0
      %p113 = por %p111, %p112
      %p114 = scmp.ne.s32.totalorder %s106, %s108
      %p115 = scmp.eq.s32.totalorder %s25, 1
      %p116 = por %p114, %p115
      %p117 = scmp.ne.s32.totalorder %s108, %s109
      %p118 = scmp.eq.s32.totalorder %s25, 0
      %p119 = por %p117, %p118
      %p120 = scmp.ne.s32.totalorder %s108, %s109
      %p121 = scmp.eq.s32.totalorder %s26, 1
      %p122 = por %p120, %p121
      %p124 = scmp.ne.s32.totalorder %s109, %s123
      %p125 = scmp.eq.s32.totalorder %s26, 0
      %p126 = por %p124, %p125
      %s128 = sadd.s32 %s127, 1
      %p131 = scmp.eq.s32.totalorder %s20, 1
      %p132 = scmp.ne.s32.totalorder %s127, %s129
      %p133 = scmp.eq.s32.totalorder %s20, 0
      %p134 = por %p132, %p133
      %p135 = scmp.ne.s32.totalorder %s127, %s129
      %p136 = scmp.eq.s32.totalorder %s25, 1
      %p137 = por %p135, %p136
      %p138 = scmp.ne.s32.totalorder %s129, %s130
      %p139 = scmp.eq.s32.totalorder %s25, 0
      %p140 = por %p138, %p139
      %p141 = scmp.ne.s32.totalorder %s129, %s130
      %p142 = scmp.eq.s32.totalorder %s26, 1
      %p143 = por %p141, %p142
      %p145 = scmp.ne.s32.totalorder %s130, %s144
      %p146 = scmp.eq.s32.totalorder %s26, 0
      %p147 = por %p145, %p146
      %s149 = sadd.s32 %s148, 1
      %p152 = scmp.eq.s32.totalorder %s20, 1
      %p153 = scmp.ne.s32.totalorder %s148, %s150
      %p154 = scmp.eq.s32.totalorder %s20, 0
      %p155 = por %p153, %p154
      %p156 = scmp.ne.s32.totalorder %s148, %s150
      %p157 = scmp.eq.s32.totalorder %s25, 1
      %p158 = por %p156, %p157
      %p159 = scmp.ne.s32.totalorder %s150, %s151
      %p160 = scmp.eq.s32.totalorder %s25, 0
      %p161 = por %p159, %p160
      %p162 = scmp.ne.s32.totalorder %s150, %s151
      %p163 = scmp.eq.s32.totalorder %s26, 1
      %p164 = por %p162, %p163
      %p166 = scmp.ne.s32.totalorder %s151, %s165
      %p167 = scmp.eq.s32.totalorder %s26, 0
      %p168 = por %p166, %p167
      %s170 = sadd.s32 %s169, 1
      %p173 = scmp.eq.s32.totalorder %s20, 1
      %p174 = scmp.ne.s32.totalorder %s169, %s171
      %p175 = scmp.eq.s32.totalorder %s20, 0
      %p176 = por %p174, %p175
      %p177 = scmp.ne.s32.totalorder %s169, %s171
      %p178 = scmp.eq.s32.totalorder %s25, 1
      %p179 = por %p177, %p178
      %p180 = scmp.ne.s32.totalorder %s171, %s172
      %p181 = scmp.eq.s32.totalorder %s25, 0
      %p182 = por %p180, %p181
      %p183 = scmp.ne.s32.totalorder %s171, %s172
      %p184 = scmp.eq.s32.totalorder %s26, 1
      %p185 = por %p183, %p184
      %p187 = scmp.ne.s32.totalorder %s172, %s186
      %p188 = scmp.eq.s32.totalorder %s26, 0
      %p189 = por %p187, %p188
      %s191 = sadd.s32 %s190, 1
      %p194 = scmp.eq.s32.totalorder %s20, 1
      %p195 = scmp.ne.s32.totalorder %s190, %s192
      %p196 = scmp.eq.s32.totalorder %s20, 0
      %p197 = por %p195, %p196
      %p198 = scmp.ne.s32.totalorder %s190, %s192
      %p199 = scmp.eq.s32.totalorder %s25, 1
      %p200 = por %p198, %p199
      %p201 = scmp.ne.s32.totalorder %s192, %s193
      %p202 = scmp.eq.s32.totalorder %s25, 0
      %p203 = por %p201, %p202
      %p204 = scmp.ne.s32.totalorder %s192, %s193
      %p205 = scmp.eq.s32.totalorder %s26, 1
      %p206 = por %p204, %p205
      %p208 = scmp.ne.s32.totalorder %s193, %s207
      %p209 = scmp.eq.s32.totalorder %s26, 0
      %p210 = por %p208, %p209
      %s212 = sadd.s32 %s211, 1
      %p215 = scmp.eq.s32.totalorder %s20, 1
      %p216 = scmp.ne.s32.totalorder %s211, %s213
      %p217 = scmp.eq.s32.totalorder %s20, 0
      %p218 = por %p216, %p217
      %p219 = scmp.ne.s32.totalorder %s211, %s213
      %p220 = scmp.eq.s32.totalorder %s25, 1
      %p221 = por %p219, %p220
      %p222 = scmp.ne.s32.totalorder %s213, %s214
      %p223 = scmp.eq.s32.totalorder %s25, 0
      %p224 = por %p222, %p223
      %p225 = scmp.ne.s32.totalorder %s213, %s214
      %p226 = scmp.eq.s32.totalorder %s26, 1
      %p227 = por %p225, %p226
      %p229 = scmp.ne.s32.totalorder %s214, %s228
      %p230 = scmp.eq.s32.totalorder %s26, 0
      %p231 = por %p229, %p230
      %s233 = sadd.s32 %s232, 1
      %p236 = scmp.eq.s32.totalorder %s20, 1
      %p237 = scmp.ne.s32.totalorder %s232, %s234
      %p238 = scmp.eq.s32.totalorder %s20, 0
      %p239 = por %p237, %p238
      %p240 = scmp.ne.s32.totalorder %s232, %s234
      %p241 = scmp.eq.s32.totalorder %s25, 1
      %p242 = por %p240, %p241
      %p243 = scmp.ne.s32.totalorder %s234, %s235
      %p244 = scmp.eq.s32.totalorder %s25, 0
      %p245 = por %p243, %p244
      %p246 = scmp.ne.s32.totalorder %s234, %s235
      %p247 = scmp.eq.s32.totalorder %s26, 1
      %p248 = por %p246, %p247
      %p250 = scmp.ne.s32.totalorder %s235, %s249
      %p251 = scmp.eq.s32.totalorder %s26, 0
      %p252 = por %p250, %p251
      %s254 = sadd.s32 %s253, 1
      %p257 = scmp.eq.s32.totalorder %s20, 1
      %p258 = scmp.ne.s32.totalorder %s253, %s255
      %p259 = scmp.eq.s32.totalorder %s20, 0
      %p260 = por %p258, %p259
      %p261 = scmp.ne.s32.totalorder %s253, %s255
      %p262 = scmp.eq.s32.totalorder %s25, 1
      %p263 = por %p261, %p262
      %p264 = scmp.ne.s32.totalorder %s255, %s256
      %p265 = scmp.eq.s32.totalorder %s25, 0
      %p266 = por %p264, %p265
      %p267 = scmp.ne.s32.totalorder %s255, %s256
      %p268 = scmp.eq.s32.totalorder %s26, 1
      %p269 = por %p267, %p268
      %p271 = scmp.ne.s32.totalorder %s256, %s270
      %p272 = scmp.eq.s32.totalorder %s26, 0
      %p273 = por %p271, %p272
      %s274 = ssub.s32 %s20, %s27
      %p275 = scmp.eq.s32.totalorder %s274, 0
      %s277 = sadd.s32 %s276, 1
      %s278 = scalar_select %p275, %s276, %s277
      %p281 = pneg %p275
      %p282 = scmp.eq.s32.totalorder %s20, 1
      %p283 = por %p281, %p282
      %p284 = scmp.ne.s32.totalorder %s276, %s279
      %p285 = scmp.eq.s32.totalorder %s20, 0
      %p286 = por %p284, %p285
      %p287 = scmp.ne.s32.totalorder %s276, %s279
      %p288 = scmp.eq.s32.totalorder %s25, 1
      %p289 = por %p287, %p288
      %p290 = scmp.ne.s32.totalorder %s279, %s280
      %p291 = scmp.eq.s32.totalorder %s25, 0
      %p292 = por %p290, %p291
      %p293 = scmp.ne.s32.totalorder %s279, %s280
      %p294 = scmp.eq.s32.totalorder %s26, 1
      %p295 = por %p293, %p294
      %p297 = scmp.ne.s32.totalorder %s280, %s296
      %p298 = scmp.eq.s32.totalorder %s26, 0
      %p299 = por %p297, %p298
      %p300 = scmp.le.s32.totalorder 1, %s20
      %p301 = scmp.lt.s32.totalorder %s20, 3
      %p302 = pnand %p300, %p301
      %p303 = pneg %p302
      // Predicated region
      $region9: #{tpu_custom_call.1} parent=5 // pred_check
        _
      $region10: #{tpu_custom_call.1} parent=5 // pred_check_branch
        %305 = sbr.rel (%p302) target = $region12
      $region11: #{tpu_custom_call.1} parent=5 // pred_region
        %s306 = ssub.s32 %s20, 1
        // Predicated region
        $region13: #{tpu_custom_call.1} parent=11 // pred_check
          %p307 = pneg %p119
        $region14: #{tpu_custom_call.1} parent=11 // pred_check_branch
          %309 = sbr.rel (%p307) target = $region16
        $region15: #{tpu_custom_call.1} parent=11 // pred_region
          _
        $region16: #{tpu_custom_call.1} parent=11 // pred_fallthru
          _
        // Predicated region
        $region17: #{tpu_custom_call.1} parent=11 // pred_check
          %p310 = pneg %p140
        $region18: #{tpu_custom_call.1} parent=11 // pred_check_branch
          %312 = sbr.rel (%p310) target = $region20
        $region19: #{tpu_custom_call.1} parent=11 // pred_region
          _
        $region20: #{tpu_custom_call.1} parent=11 // pred_fallthru
          _
        // Predicated region
        $region21: #{tpu_custom_call.1} parent=11 // pred_check
          %p313 = pneg %p161
        $region22: #{tpu_custom_call.1} parent=11 // pred_check_branch
          %315 = sbr.rel (%p313) target = $region24
        $region23: #{tpu_custom_call.1} parent=11 // pred_region
          _
        $region24: #{tpu_custom_call.1} parent=11 // pred_fallthru
          _
        // Predicated region
        $region25: #{tpu_custom_call.1} parent=11 // pred_check
          %p316 = pneg %p182
        $region26: #{tpu_custom_call.1} parent=11 // pred_check_branch
          %318 = sbr.rel (%p316) target = $region28
        $region27: #{tpu_custom_call.1} parent=11 // pred_region
          _
        $region28: #{tpu_custom_call.1} parent=11 // pred_fallthru
          _
        // Predicated region
        $region29: #{tpu_custom_call.1} parent=11 // pred_check
          %p319 = pneg %p203
        $region30: #{tpu_custom_call.1} parent=11 // pred_check_branch
          %321 = sbr.rel (%p319) target = $region32
        $region31: #{tpu_custom_call.1} parent=11 // pred_region
          _
        $region32: #{tpu_custom_call.1} parent=11 // pred_fallthru
          _
        // Predicated region
        $region33: #{tpu_custom_call.1} parent=11 // pred_check
          %p322 = pneg %p224
        $region34: #{tpu_custom_call.1} parent=11 // pred_check_branch
          %324 = sbr.rel (%p322) target = $region36
        $region35: #{tpu_custom_call.1} parent=11 // pred_region
          _
        $region36: #{tpu_custom_call.1} parent=11 // pred_fallthru
          _
        // Predicated region
        $region37: #{tpu_custom_call.1} parent=11 // pred_check
          %p325 = pneg %p245
        $region38: #{tpu_custom_call.1} parent=11 // pred_check_branch
          %327 = sbr.rel (%p325) target = $region40
        $region39: #{tpu_custom_call.1} parent=11 // pred_region
          _
        $region40: #{tpu_custom_call.1} parent=11 // pred_fallthru
          _
        // Predicated region
        $region41: #{tpu_custom_call.1} parent=11 // pred_check
          %p328 = pneg %p266
        $region42: #{tpu_custom_call.1} parent=11 // pred_check_branch
          %330 = sbr.rel (%p328) target = $region44
        $region43: #{tpu_custom_call.1} parent=11 // pred_region
          _
        $region44: #{tpu_custom_call.1} parent=11 // pred_fallthru
          _
      $region12: #{tpu_custom_call.1} parent=5 // pred_fallthru
        _
      %p331 = scmp.lt.s32.totalorder %s20, 2
      // Predicated region
      $region45: #{tpu_custom_call.1} parent=5 // pred_check
        %p332 = pneg %p331
      $region46: #{tpu_custom_call.1} parent=5 // pred_check_branch
        %334 = sbr.rel (%p332) target = $region48
      $region47: #{tpu_custom_call.1} parent=5 // pred_region
        // Predicated region
        $region49: #{tpu_custom_call.1} parent=47 // pred_check
          %p335 = pneg %p40
        $region50: #{tpu_custom_call.1} parent=47 // pred_check_branch
          %337 = sbr.rel (%p335) target = $region52
        $region51: #{tpu_custom_call.1} parent=47 // pred_region
          %s338 = smul.u32 2, %s20
          %p339 = scmp.lt.s32.totalorder %s338, 3
          %s340 = scalar_select %p339, %s338, 3
          %s341 = smul.addr %s340, 4
          %s342 = scalar_lea.vmem %s0, %s341
          %s343 = smul.u32 2, %s20
        $region52: #{tpu_custom_call.1} parent=47 // pred_fallthru
          _
        // Predicated region
        $region53: #{tpu_custom_call.1} parent=47 // pred_check
          %p344 = pneg %p66
        $region54: #{tpu_custom_call.1} parent=47 // pred_check_branch
          %346 = sbr.rel (%p344) target = $region56
        $region55: #{tpu_custom_call.1} parent=47 // pred_region
          %s347 = smul.u32 2, %s20
          %p348 = scmp.lt.s32.totalorder %s347, 3
          %s349 = scalar_select %p348, %s347, 3
          %s350 = smul.addr %s349, 4
          %s351 = scalar_lea.vmem %s1, %s350
          %s352 = smul.u32 2, %s20
        $region56: #{tpu_custom_call.1} parent=47 // pred_fallthru
          _
        // Predicated region
        $region57: #{tpu_custom_call.1} parent=47 // pred_check
          %p353 = pneg %p92
        $region58: #{tpu_custom_call.1} parent=47 // pred_check_branch
          %355 = sbr.rel (%p353) target = $region60
        $region59: #{tpu_custom_call.1} parent=47 // pred_region
          %s356 = smul.u32 2, %s20
          %p357 = scmp.lt.s32.totalorder %s356, 3
          %s358 = scalar_select %p357, %s356, 3
          %s359 = smul.addr %s358, 4
          %s360 = scalar_lea.vmem %s2, %s359
          %s361 = smul.u32 2, %s20
        $region60: #{tpu_custom_call.1} parent=47 // pred_fallthru
          _
      $region48: #{tpu_custom_call.1} parent=5 // pred_fallthru
        _
      %p362 = scmp.le.s32.totalorder 1, %s20
      %p363 = scmp.lt.s32.totalorder %s20, 3
      %p364 = pnand %p362, %p363
      %p365 = pneg %p364
      // Predicated region
      $region61: #{tpu_custom_call.1} parent=5 // pred_check
        _
      $region62: #{tpu_custom_call.1} parent=5 // pred_check_branch
        %367 = sbr.rel (%p364) target = $region64
      $region63: #{tpu_custom_call.1} parent=5 // pred_region
        %s368 = ssub.s32 %s20, 1
        %s369 = smul.u32 2, %s25
        %p370 = scmp.lt.s32.totalorder %s369, 3
        %s371 = scalar_select %p370, %s369, 3
        %s372 = smul.addr %s371, 4
        %s373 = scalar_lea.vmem %s0, %s372
        %p374 = pneg %p46
        %p375 = pneg %p43
        %s376 = smul.u32 2, %s25
        %p377 = scmp.lt.s32.totalorder %s376, 3
        %s378 = scalar_select %p377, %s376, 3
        %s379 = smul.addr %s378, 4
        %s380 = scalar_lea.vmem %s1, %s379
        %p381 = pneg %p72
        %p382 = pneg %p69
        %s383 = smul.u32 2, %s25
        %p384 = scmp.lt.s32.totalorder %s383, 3
        %s385 = scalar_select %p384, %s383, 3
        %s386 = smul.addr %s385, 4
        %s387 = scalar_lea.vmem %s2, %s386
        %p388 = pneg %p98
        %p389 = pneg %p95
        %p390 = pneg %p119
        %p391 = pneg %p116
        %p392 = pneg %p140
        %p393 = pneg %p137
        %p394 = pneg %p161
        %p395 = pneg %p158
        %p396 = pneg %p182
        %p397 = pneg %p179
        %p398 = pneg %p203
        %p399 = pneg %p200
        %p400 = pneg %p224
        %p401 = pneg %p221
        %p402 = pneg %p245
        %p403 = pneg %p242
        %p404 = pneg %p266
        %p405 = pneg %p263
        %p406 = pneg %p292
        %p407 = pneg %p289
        %s408 = sand.u32 %s279, 1
        %s409 = scalar_lea.sflag [#allocation3], %s408
        %s410 = sand.u32 %s279, 1
        %s411 = smul.addr %s410, 16
        %s412 = scalar_lea.vmem [#allocation2], %s411
        %s413 = smul.u32 2, %s25
        %p414 = scmp.lt.s32.totalorder %s413, 3
        %s415 = scalar_select %p414, %s413, 3
        %s416 = smul.addr %s415, 4
        %s417 = scalar_lea.vmem %s0, %s416
        %s418 = smul.u32 2, %s25
        %s419 = smul.u32 2, %s25
        %p420 = scmp.lt.s32.totalorder %s419, 3
        %s421 = scalar_select %p420, %s419, 3
        %s422 = smul.addr %s421, 4
        %s423 = scalar_lea.vmem %s1, %s422
        %s424 = smul.u32 2, %s25
        %s425 = smul.u32 2, %s25
        %p426 = scmp.lt.s32.totalorder %s425, 3
        %s427 = scalar_select %p426, %s425, 3
        %s428 = smul.addr %s427, 4
        %s429 = scalar_lea.vmem %s2, %s428
        %s430 = smul.u32 2, %s25
        %s431 = smul.u32 2, %s25
        %v433 = vld [vmem:[%s417] sm:$0xf]
        %v434 = vld [vmem:[%s417 + $0x4] sm:$0xf]
        %v435 = vld [vmem:[%s423] sm:$0xf]
        %v436 = vld [vmem:[%s423 + $0x4] sm:$0xf]
        %v437 = vld [vmem:[%s429] sm:$0xf]
        %v438 = vld [vmem:[%s429 + $0x4] sm:$0xf]
        %v439 = vld [vmem:[%s3] sm:$0xf]
        %v440 = vld [vmem:[%s3 + $0x4] sm:$0xf]
        %v443 = vunpack.c.l.b16 %v433
        %v444 = vunpack.c.l.b16 %v434
        %v445 = vpack.c.b16 %v444, %v443
        %v448 = vunpack.c.l.b16 %v439
        %v449 = vunpack.c.l.b16 %v440
        %v450 = vpack.c.b16 %v449, %v448
        %vm452 = vcmask 130048
        %v454 = vsel %vm452, %v445, 0
        %456 = vmatprep.subr.bf16.mxu0 0
        %457 = vmatpush1.bf16.msra.mxu0 %v450
        %458 = vmatprep.subr.bf16.mxu0 0
        %459 = vmatpush1.bf16.msra.mxu0 0
        %460 = vmatprep.subr.bf16.mxu0 0
        %461 = vmatpush1.bf16.msra.mxu0 0
        %462 = vmatprep.subr.bf16.mxu0 0
        %463 = vmatpush1.bf16.msra.mxu0 0
        %464 = vmatprep.subr.bf16.mxu0 0
        %465 = vmatpush1.bf16.msra.mxu0 0
        %466 = vmatprep.subr.bf16.mxu0 0
        %467 = vmatpush1.bf16.msra.mxu0 0
        %468 = vmatprep.subr.bf16.mxu0 0
        %469 = vmatpush1.bf16.msra.mxu0 0
        %470 = vmatprep.subr.bf16.mxu0 0
        %471 = vmatpush1.bf16.msra.mxu0 0
        %472 = vmatprep.subr.bf16.mxu0 0
        %473 = vmatpush1.bf16.msra.mxu0 0
        %474 = vmatprep.subr.bf16.mxu0 0
        %475 = vmatpush1.bf16.msra.mxu0 0
        %476 = vmatprep.subr.bf16.mxu0 0
        %477 = vmatpush1.bf16.msra.mxu0 0
        %478 = vmatprep.subr.bf16.mxu0 0
        %479 = vmatpush1.bf16.msra.mxu0 0
        %480 = vmatprep.subr.bf16.mxu0 0
        %481 = vmatpush1.bf16.msra.mxu0 0
        %482 = vmatprep.subr.bf16.mxu0 0
        %483 = vmatpush1.bf16.msra.mxu0 0
        %484 = vmatprep.subr.bf16.mxu0 0
        %485 = vmatpush1.bf16.msra.mxu0 0
        %486 = vmatprep.subr.bf16.mxu0 0
        %487 = vmatpush1.bf16.msra.mxu0 0
        %488 = vmatprep.mubr.bf16.mxu0 0
        %489 = vmatmul.mubr.bf16.gmra.mrb[0].mxu0 %v454
        %v490 = vpop.f32.mrb[0].mxu0
        %v491 = vadd.f32 0.0, %v490
        %v492 = vpop.f32.mrb[0].mxu0
        %v493 = vpop.f32.mrb[0].mxu0
        %v494 = vadd.f32 0.0, %v493
        %v495 = vpop.f32.mrb[0].mxu0
        %496 = vdwg.mxu0
        %s497 = scalar_lea.vmem %s3, 8
        %v498 = vld [vmem:[%s497] sm:$0xf]
        %v499 = vld [vmem:[%s497 + $0x4] sm:$0xf]
        %v502 = vunpack.c.l.b16 %v498
        %v503 = vunpack.c.l.b16 %v499
        %v504 = vpack.c.b16 %v503, %v502
        %506 = vmatprep.subr.bf16.mxu0 0
        %507 = vmatpush1.bf16.msra.mxu0 %v504
        %508 = vmatprep.subr.bf16.mxu0 0
        %509 = vmatpush1.bf16.msra.mxu0 0
        %510 = vmatprep.subr.bf16.mxu0 0
        %511 = vmatpush1.bf16.msra.mxu0 0
        %512 = vmatprep.subr.bf16.mxu0 0
        %513 = vmatpush1.bf16.msra.mxu0 0
        %514 = vmatprep.subr.bf16.mxu0 0
        %515 = vmatpush1.bf16.msra.mxu0 0
        %516 = vmatprep.subr.bf16.mxu0 0
        %517 = vmatpush1.bf16.msra.mxu0 0
        %518 = vmatprep.subr.bf16.mxu0 0
        %519 = vmatpush1.bf16.msra.mxu0 0
        %520 = vmatprep.subr.bf16.mxu0 0
        %521 = vmatpush1.bf16.msra.mxu0 0
        %522 = vmatprep.subr.bf16.mxu0 0
        %523 = vmatpush1.bf16.msra.mxu0 0
        %524 = vmatprep.subr.bf16.mxu0 0
        %525 = vmatpush1.bf16.msra.mxu0 0
        %526 = vmatprep.subr.bf16.mxu0 0
        %527 = vmatpush1.bf16.msra.mxu0 0
        %528 = vmatprep.subr.bf16.mxu0 0
        %529 = vmatpush1.bf16.msra.mxu0 0
        %530 = vmatprep.subr.bf16.mxu0 0
        %531 = vmatpush1.bf16.msra.mxu0 0
        %532 = vmatprep.subr.bf16.mxu0 0
        %533 = vmatpush1.bf16.msra.mxu0 0
        %534 = vmatprep.subr.bf16.mxu0 0
        %535 = vmatpush1.bf16.msra.mxu0 0
        %536 = vmatprep.subr.bf16.mxu0 0
        %537 = vmatpush1.bf16.msra.mxu0 0
        %538 = vmatprep.mubr.bf16.mxu0 0
        %539 = vmatmul.mubr.bf16.gmra.mrb[0].mxu0 %v454
        %v540 = vpop.f32.mrb[0].mxu0
        %v541 = vadd.f32 0.0, %v540
        %v542 = vpop.f32.mrb[0].mxu0
        %v543 = vpop.f32.mrb[0].mxu0
        %v544 = vadd.f32 0.0, %v543
        %v545 = vpop.f32.mrb[0].mxu0
        %546 = vdwg.mxu0
        %s547 = scalar_lea.vmem %s3, 16
        %v548 = vld [vmem:[%s547] sm:$0xf]
        %v549 = vld [vmem:[%s547 + $0x4] sm:$0xf]
        %v552 = vunpack.c.l.b16 %v548
        %v553 = vunpack.c.l.b16 %v549
        %v554 = vpack.c.b16 %v553, %v552
        %556 = vmatprep.subr.bf16.mxu0 0
        %557 = vmatpush1.bf16.msra.mxu0 %v554
        %558 = vmatprep.subr.bf16.mxu0 0
        %559 = vmatpush1.bf16.msra.mxu0 0
        %560 = vmatprep.subr.bf16.mxu0 0
        %561 = vmatpush1.bf16.msra.mxu0 0
        %562 = vmatprep.subr.bf16.mxu0 0
        %563 = vmatpush1.bf16.msra.mxu0 0
        %564 = vmatprep.subr.bf16.mxu0 0
        %565 = vmatpush1.bf16.msra.mxu0 0
        %566 = vmatprep.subr.bf16.mxu0 0
        %567 = vmatpush1.bf16.msra.mxu0 0
        %568 = vmatprep.subr.bf16.mxu0 0
        %569 = vmatpush1.bf16.msra.mxu0 0
        %570 = vmatprep.subr.bf16.mxu0 0
        %571 = vmatpush1.bf16.msra.mxu0 0
        %572 = vmatprep.subr.bf16.mxu0 0
        %573 = vmatpush1.bf16.msra.mxu0 0
        %574 = vmatprep.subr.bf16.mxu0 0
        %575 = vmatpush1.bf16.msra.mxu0 0
        %576 = vmatprep.subr.bf16.mxu0 0
        %577 = vmatpush1.bf16.msra.mxu0 0
        %578 = vmatprep.subr.bf16.mxu0 0
        %579 = vmatpush1.bf16.msra.mxu0 0
        %580 = vmatprep.subr.bf16.mxu0 0
        %581 = vmatpush1.bf16.msra.mxu0 0
        %582 = vmatprep.subr.bf16.mxu0 0
        %583 = vmatpush1.bf16.msra.mxu0 0
        %584 = vmatprep.subr.bf16.mxu0 0
        %585 = vmatpush1.bf16.msra.mxu0 0
        %586 = vmatprep.subr.bf16.mxu0 0
        %587 = vmatpush1.bf16.msra.mxu0 0
        %588 = vmatprep.mubr.bf16.mxu0 0
        %589 = vmatmul.mubr.bf16.gmra.mrb[0].mxu0 %v454
        %v590 = vpop.f32.mrb[0].mxu0
        %v591 = vadd.f32 0.0, %v590
        %v592 = vpop.f32.mrb[0].mxu0
        %v593 = vpop.f32.mrb[0].mxu0
        %v594 = vadd.f32 0.0, %v593
        %v595 = vpop.f32.mrb[0].mxu0
        %596 = vdwg.mxu0
        %s597 = scalar_lea.vmem %s3, 24
        %v598 = vld [vmem:[%s597] sm:$0xf]
        %v599 = vld [vmem:[%s597 + $0x4] sm:$0xf]
        %v602 = vunpack.c.l.b16 %v598
        %v603 = vunpack.c.l.b16 %v599
        %v604 = vpack.c.b16 %v603, %v602
        %606 = vmatprep.subr.bf16.mxu0 0
        %607 = vmatpush1.bf16.msra.mxu0 %v604
        %608 = vmatprep.subr.bf16.mxu0 0
        %609 = vmatpush1.bf16.msra.mxu0 0
        %610 = vmatprep.subr.bf16.mxu0 0
        %611 = vmatpush1.bf16.msra.mxu0 0
        %612 = vmatprep.subr.bf16.mxu0 0
        %613 = vmatpush1.bf16.msra.mxu0 0
        %614 = vmatprep.subr.bf16.mxu0 0
        %615 = vmatpush1.bf16.msra.mxu0 0
        %616 = vmatprep.subr.bf16.mxu0 0
        %617 = vmatpush1.bf16.msra.mxu0 0
        %618 = vmatprep.subr.bf16.mxu0 0
        %619 = vmatpush1.bf16.msra.mxu0 0
        %620 = vmatprep.subr.bf16.mxu0 0
        %621 = vmatpush1.bf16.msra.mxu0 0
        %622 = vmatprep.subr.bf16.mxu0 0
        %623 = vmatpush1.bf16.msra.mxu0 0
        %624 = vmatprep.subr.bf16.mxu0 0
        %625 = vmatpush1.bf16.msra.mxu0 0
        %626 = vmatprep.subr.bf16.mxu0 0
        %627 = vmatpush1.bf16.msra.mxu0 0
        %628 = vmatprep.subr.bf16.mxu0 0
        %629 = vmatpush1.bf16.msra.mxu0 0
        %630 = vmatprep.subr.bf16.mxu0 0
        %631 = vmatpush1.bf16.msra.mxu0 0
        %632 = vmatprep.subr.bf16.mxu0 0
        %633 = vmatpush1.bf16.msra.mxu0 0
        %634 = vmatprep.subr.bf16.mxu0 0
        %635 = vmatpush1.bf16.msra.mxu0 0
        %636 = vmatprep.subr.bf16.mxu0 0
        %637 = vmatpush1.bf16.msra.mxu0 0
        %638 = vmatprep.mubr.bf16.mxu0 0
        %639 = vmatmul.mubr.bf16.gmra.mrb[0].mxu0 %v454
        %v640 = vpop.f32.mrb[0].mxu0
        %v641 = vadd.f32 0.0, %v640
        %v642 = vpop.f32.mrb[0].mxu0
        %v643 = vpop.f32.mrb[0].mxu0
        %v644 = vadd.f32 0.0, %v643
        %v645 = vpop.f32.mrb[0].mxu0
        %646 = vdwg.mxu0
        %v647 = vld [vmem:[%s4] sm:$0x1]
        %v648 = vld [vmem:[%s4 + $0x1] sm:$0x1]
        %v649 = vld [vmem:[%s4 + $0x2] sm:$0x1]
        %v650 = vld [vmem:[%s4 + $0x3] sm:$0x1]
        %v655 = vlaneseq
        %v656 = vshrl.u32 %v655, 7
        %v657 = vsub.s32 0, %v656
        %v658 = vrot.slane %v647, %v657
        %v659 = vlaneseq
        %v660 = vshrl.u32 %v659, 7
        %v661 = vsub.s32 0, %v660
        %v662 = vrot.slane %v648, %v661
        %v663 = vlaneseq
        %v664 = vshrl.u32 %v663, 7
        %v665 = vsub.s32 0, %v664
        %v666 = vrot.slane %v649, %v665
        %v667 = vlaneseq
        %v668 = vshrl.u32 %v667, 7
        %v669 = vsub.s32 0, %v668
        %v670 = vrot.slane %v650, %v669
        %v675 = vadd.f32 %v491, %v658
        %v676 = vadd.f32 %v494, %v658
        %v677 = vadd.f32 %v541, %v662
        %v678 = vadd.f32 %v544, %v662
        %v679 = vadd.f32 %v591, %v666
        %v680 = vadd.f32 %v594, %v666
        %v681 = vadd.f32 %v641, %v670
        %v682 = vadd.f32 %v644, %v670
        %v683 = vmul.f32 %v675, 0.35355338
        %v684 = vmul.f32 %v676, 0.35355338
        %v685 = vmul.f32 %v677, 0.35355338
        %v686 = vmul.f32 %v678, 0.35355338
        %v687 = vmul.f32 %v679, 0.35355338
        %v688 = vmul.f32 %v680, 0.35355338
        %v689 = vmul.f32 %v681, 0.35355338
        %v690 = vmul.f32 %v682, 0.35355338
        %v691 = vpack.c.bf16 %v684, %v683
        %v692 = vpack.c.bf16 %v686, %v685
        %v693 = vpack.c.bf16 %v688, %v687
        %v694 = vpack.c.bf16 %v690, %v689
        %v695 = vld [vmem:[%s5] sm:$0xf]
        %v696 = vld [vmem:[%s5 + $0x4] sm:$0xf]
        %v699 = vunpack.c.l.b16 %v435
        %v700 = vunpack.c.l.b16 %v436
        %v701 = vpack.c.b16 %v700, %v699
        %v704 = vunpack.c.l.b16 %v695
        %v705 = vunpack.c.l.b16 %v696
        %v706 = vpack.c.b16 %v705, %v704
        %v709 = vsel %vm452, %v701, 0
        %711 = vmatprep.subr.bf16.mxu0 0
        %712 = vmatpush1.bf16.msra.mxu0 %v706
        %713 = vmatprep.subr.bf16.mxu0 0
        %714 = vmatpush1.bf16.msra.mxu0 0
        %715 = vmatprep.subr.bf16.mxu0 0
        %716 = vmatpush1.bf16.msra.mxu0 0
        %717 = vmatprep.subr.bf16.mxu0 0
        %718 = vmatpush1.bf16.msra.mxu0 0
        %719 = vmatprep.subr.bf16.mxu0 0
        %720 = vmatpush1.bf16.msra.mxu0 0
        %721 = vmatprep.subr.bf16.mxu0 0
        %722 = vmatpush1.bf16.msra.mxu0 0
        %723 = vmatprep.subr.bf16.mxu0 0
        %724 = vmatpush1.bf16.msra.mxu0 0
        %725 = vmatprep.subr.bf16.mxu0 0
        %726 = vmatpush1.bf16.msra.mxu0 0
        %727 = vmatprep.subr.bf16.mxu0 0
        %728 = vmatpush1.bf16.msra.mxu0 0
        %729 = vmatprep.subr.bf16.mxu0 0
        %730 = vmatpush1.bf16.msra.mxu0 0
        %731 = vmatprep.subr.bf16.mxu0 0
        %732 = vmatpush1.bf16.msra.mxu0 0
        %733 = vmatprep.subr.bf16.mxu0 0
        %734 = vmatpush1.bf16.msra.mxu0 0
        %735 = vmatprep.subr.bf16.mxu0 0
        %736 = vmatpush1.bf16.msra.mxu0 0
        %737 = vmatprep.subr.bf16.mxu0 0
        %738 = vmatpush1.bf16.msra.mxu0 0
        %739 = vmatprep.subr.bf16.mxu0 0
        %740 = vmatpush1.bf16.msra.mxu0 0
        %741 = vmatprep.subr.bf16.mxu0 0
        %742 = vmatpush1.bf16.msra.mxu0 0
        %743 = vmatprep.mubr.bf16.mxu0 0
        %744 = vmatmul.mubr.bf16.gmra.mrb[0].mxu0 %v709
        %v745 = vpop.f32.mrb[0].mxu0
        %v746 = vadd.f32 0.0, %v745
        %v747 = vpop.f32.mrb[0].mxu0
        %v748 = vpop.f32.mrb[0].mxu0
        %v749 = vadd.f32 0.0, %v748
        %v750 = vpop.f32.mrb[0].mxu0
        %751 = vdwg.mxu0
        %s752 = scalar_lea.vmem %s5, 8
        %v753 = vld [vmem:[%s752] sm:$0xf]
        %v754 = vld [vmem:[%s752 + $0x4] sm:$0xf]
        %v757 = vunpack.c.l.b16 %v753
        %v758 = vunpack.c.l.b16 %v754
        %v759 = vpack.c.b16 %v758, %v757
        %761 = vmatprep.subr.bf16.mxu0 0
        %762 = vmatpush1.bf16.msra.mxu0 %v759
        %763 = vmatprep.subr.bf16.mxu0 0
        %764 = vmatpush1.bf16.msra.mxu0 0
        %765 = vmatprep.subr.bf16.mxu0 0
        %766 = vmatpush1.bf16.msra.mxu0 0
        %767 = vmatprep.subr.bf16.mxu0 0
        %768 = vmatpush1.bf16.msra.mxu0 0
        %769 = vmatprep.subr.bf16.mxu0 0
        %770 = vmatpush1.bf16.msra.mxu0 0
        %771 = vmatprep.subr.bf16.mxu0 0
        %772 = vmatpush1.bf16.msra.mxu0 0
        %773 = vmatprep.subr.bf16.mxu0 0
        %774 = vmatpush1.bf16.msra.mxu0 0
        %775 = vmatprep.subr.bf16.mxu0 0
        %776 = vmatpush1.bf16.msra.mxu0 0
        %777 = vmatprep.subr.bf16.mxu0 0
        %778 = vmatpush1.bf16.msra.mxu0 0
        %779 = vmatprep.subr.bf16.mxu0 0
        %780 = vmatpush1.bf16.msra.mxu0 0
        %781 = vmatprep.subr.bf16.mxu0 0
        %782 = vmatpush1.bf16.msra.mxu0 0
        %783 = vmatprep.subr.bf16.mxu0 0
        %784 = vmatpush1.bf16.msra.mxu0 0
        %785 = vmatprep.subr.bf16.mxu0 0
        %786 = vmatpush1.bf16.msra.mxu0 0
        %787 = vmatprep.subr.bf16.mxu0 0
        %788 = vmatpush1.bf16.msra.mxu0 0
        %789 = vmatprep.subr.bf16.mxu0 0
        %790 = vmatpush1.bf16.msra.mxu0 0
        %791 = vmatprep.subr.bf16.mxu0 0
        %792 = vmatpush1.bf16.msra.mxu0 0
        %793 = vmatprep.mubr.bf16.mxu0 0
        %794 = vmatmul.mubr.bf16.gmra.mrb[0].mxu0 %v709
        %v795 = vpop.f32.mrb[0].mxu0
        %v796 = vadd.f32 0.0, %v795
        %v797 = vpop.f32.mrb[0].mxu0
        %v798 = vpop.f32.mrb[0].mxu0
        %v799 = vadd.f32 0.0, %v798
        %v800 = vpop.f32.mrb[0].mxu0
        %801 = vdwg.mxu0
        %s802 = scalar_lea.vmem %s5, 16
        %v803 = vld [vmem:[%s802] sm:$0xf]
        %v804 = vld [vmem:[%s802 + $0x4] sm:$0xf]
        %v807 = vunpack.c.l.b16 %v803
        %v808 = vunpack.c.l.b16 %v804
        %v809 = vpack.c.b16 %v808, %v807
        %811 = vmatprep.subr.bf16.mxu0 0
        %812 = vmatpush1.bf16.msra.mxu0 %v809
        %813 = vmatprep.subr.bf16.mxu0 0
        %814 = vmatpush1.bf16.msra.mxu0 0
        %815 = vmatprep.subr.bf16.mxu0 0
        %816 = vmatpush1.bf16.msra.mxu0 0
        %817 = vmatprep.subr.bf16.mxu0 0
        %818 = vmatpush1.bf16.msra.mxu0 0
        %819 = vmatprep.subr.bf16.mxu0 0
        %820 = vmatpush1.bf16.msra.mxu0 0
        %821 = vmatprep.subr.bf16.mxu0 0
        %822 = vmatpush1.bf16.msra.mxu0 0
        %823 = vmatprep.subr.bf16.mxu0 0
        %824 = vmatpush1.bf16.msra.mxu0 0
        %825 = vmatprep.subr.bf16.mxu0 0
        %826 = vmatpush1.bf16.msra.mxu0 0
        %827 = vmatprep.subr.bf16.mxu0 0
        %828 = vmatpush1.bf16.msra.mxu0 0
        %829 = vmatprep.subr.bf16.mxu0 0
        %830 = vmatpush1.bf16.msra.mxu0 0
        %831 = vmatprep.subr.bf16.mxu0 0
        %832 = vmatpush1.bf16.msra.mxu0 0
        %833 = vmatprep.subr.bf16.mxu0 0
        %834 = vmatpush1.bf16.msra.mxu0 0
        %835 = vmatprep.subr.bf16.mxu0 0
        %836 = vmatpush1.bf16.msra.mxu0 0
        %837 = vmatprep.subr.bf16.mxu0 0
        %838 = vmatpush1.bf16.msra.mxu0 0
        %839 = vmatprep.subr.bf16.mxu0 0
        %840 = vmatpush1.bf16.msra.mxu0 0
        %841 = vmatprep.subr.bf16.mxu0 0
        %842 = vmatpush1.bf16.msra.mxu0 0
        %843 = vmatprep.mubr.bf16.mxu0 0
        %844 = vmatmul.mubr.bf16.gmra.mrb[0].mxu0 %v709
        %v845 = vpop.f32.mrb[0].mxu0
        %v846 = vadd.f32 0.0, %v845
        %v847 = vpop.f32.mrb[0].mxu0
        %v848 = vpop.f32.mrb[0].mxu0
        %v849 = vadd.f32 0.0, %v848
        %v850 = vpop.f32.mrb[0].mxu0
        %851 = vdwg.mxu0
        %s852 = scalar_lea.vmem %s5, 24
        %v853 = vld [vmem:[%s852] sm:$0xf]
        %v854 = vld [vmem:[%s852 + $0x4] sm:$0xf]
        %v857 = vunpack.c.l.b16 %v853
        %v858 = vunpack.c.l.b16 %v854
        %v859 = vpack.c.b16 %v858, %v857
        %861 = vmatprep.subr.bf16.mxu0 0
        %862 = vmatpush1.bf16.msra.mxu0 %v859
        %863 = vmatprep.subr.bf16.mxu0 0
        %864 = vmatpush1.bf16.msra.mxu0 0
        %865 = vmatprep.subr.bf16.mxu0 0
        %866 = vmatpush1.bf16.msra.mxu0 0
        %867 = vmatprep.subr.bf16.mxu0 0
        %868 = vmatpush1.bf16.msra.mxu0 0
        %869 = vmatprep.subr.bf16.mxu0 0
        %870 = vmatpush1.bf16.msra.mxu0 0
        %871 = vmatprep.subr.bf16.mxu0 0
        %872 = vmatpush1.bf16.msra.mxu0 0
        %873 = vmatprep.subr.bf16.mxu0 0
        %874 = vmatpush1.bf16.msra.mxu0 0
        %875 = vmatprep.subr.bf16.mxu0 0
        %876 = vmatpush1.bf16.msra.mxu0 0
        %877 = vmatprep.subr.bf16.mxu0 0
        %878 = vmatpush1.bf16.msra.mxu0 0
        %879 = vmatprep.subr.bf16.mxu0 0
        %880 = vmatpush1.bf16.msra.mxu0 0
        %881 = vmatprep.subr.bf16.mxu0 0
        %882 = vmatpush1.bf16.msra.mxu0 0
        %883 = vmatprep.subr.bf16.mxu0 0
        %884 = vmatpush1.bf16.msra.mxu0 0
        %885 = vmatprep.subr.bf16.mxu0 0
        %886 = vmatpush1.bf16.msra.mxu0 0
        %887 = vmatprep.subr.bf16.mxu0 0
        %888 = vmatpush1.bf16.msra.mxu0 0
        %889 = vmatprep.subr.bf16.mxu0 0
        %890 = vmatpush1.bf16.msra.mxu0 0
        %891 = vmatprep.subr.bf16.mxu0 0
        %892 = vmatpush1.bf16.msra.mxu0 0
        %893 = vmatprep.mubr.bf16.mxu0 0
        %894 = vmatmul.mubr.bf16.gmra.mrb[0].mxu0 %v709
        %v895 = vpop.f32.mrb[0].mxu0
        %v896 = vadd.f32 0.0, %v895
        %v897 = vpop.f32.mrb[0].mxu0
        %v898 = vpop.f32.mrb[0].mxu0
        %v899 = vadd.f32 0.0, %v898
        %v900 = vpop.f32.mrb[0].mxu0
        %901 = vdwg.mxu0
        %v902 = vld [vmem:[%s6] sm:$0x1]
        %v903 = vld [vmem:[%s6 + $0x1] sm:$0x1]
        %v904 = vld [vmem:[%s6 + $0x2] sm:$0x1]
        %v905 = vld [vmem:[%s6 + $0x3] sm:$0x1]
        %v910 = vlaneseq
        %v911 = vshrl.u32 %v910, 7
        %v912 = vsub.s32 0, %v911
        %v913 = vrot.slane %v902, %v912
        %v914 = vlaneseq
        %v915 = vshrl.u32 %v914, 7
        %v916 = vsub.s32 0, %v915
        %v917 = vrot.slane %v903, %v916
        %v918 = vlaneseq
        %v919 = vshrl.u32 %v918, 7
        %v920 = vsub.s32 0, %v919
        %v921 = vrot.slane %v904, %v920
        %v922 = vlaneseq
        %v923 = vshrl.u32 %v922, 7
        %v924 = vsub.s32 0, %v923
        %v925 = vrot.slane %v905, %v924
        %v930 = vadd.f32 %v746, %v913
        %v931 = vadd.f32 %v749, %v913
        %v932 = vadd.f32 %v796, %v917
        %v933 = vadd.f32 %v799, %v917
        %v934 = vadd.f32 %v846, %v921
        %v935 = vadd.f32 %v849, %v921
        %v936 = vadd.f32 %v896, %v925
        %v937 = vadd.f32 %v899, %v925
        %v938 = vpack.c.bf16 %v931, %v930
        %v939 = vpack.c.bf16 %v933, %v932
        %v940 = vpack.c.bf16 %v935, %v934
        %v941 = vpack.c.bf16 %v937, %v936
        %v942 = vld [vmem:[%s7] sm:$0xf]
        %v943 = vld [vmem:[%s7 + $0x4] sm:$0xf]
        %v946 = vunpack.c.l.b16 %v437
        %v947 = vunpack.c.l.b16 %v438
        %v948 = vpack.c.b16 %v947, %v946
        %v951 = vunpack.c.l.b16 %v942
        %v952 = vunpack.c.l.b16 %v943
        %v953 = vpack.c.b16 %v952, %v951
        %v956 = vsel %vm452, %v948, 0
        %958 = vmatprep.subr.bf16.mxu0 0
        %959 = vmatpush1.bf16.msra.mxu0 %v953
        %960 = vmatprep.subr.bf16.mxu0 0
        %961 = vmatpush1.bf16.msra.mxu0 0
        %962 = vmatprep.subr.bf16.mxu0 0
        %963 = vmatpush1.bf16.msra.mxu0 0
        %964 = vmatprep.subr.bf16.mxu0 0
        %965 = vmatpush1.bf16.msra.mxu0 0
        %966 = vmatprep.subr.bf16.mxu0 0
        %967 = vmatpush1.bf16.msra.mxu0 0
        %968 = vmatprep.subr.bf16.mxu0 0
        %969 = vmatpush1.bf16.msra.mxu0 0
        %970 = vmatprep.subr.bf16.mxu0 0
        %971 = vmatpush1.bf16.msra.mxu0 0
        %972 = vmatprep.subr.bf16.mxu0 0
        %973 = vmatpush1.bf16.msra.mxu0 0
        %974 = vmatprep.subr.bf16.mxu0 0
        %975 = vmatpush1.bf16.msra.mxu0 0
        %976 = vmatprep.subr.bf16.mxu0 0
        %977 = vmatpush1.bf16.msra.mxu0 0
        %978 = vmatprep.subr.bf16.mxu0 0
        %979 = vmatpush1.bf16.msra.mxu0 0
        %980 = vmatprep.subr.bf16.mxu0 0
        %981 = vmatpush1.bf16.msra.mxu0 0
        %982 = vmatprep.subr.bf16.mxu0 0
        %983 = vmatpush1.bf16.msra.mxu0 0
        %984 = vmatprep.subr.bf16.mxu0 0
        %985 = vmatpush1.bf16.msra.mxu0 0
        %986 = vmatprep.subr.bf16.mxu0 0
        %987 = vmatpush1.bf16.msra.mxu0 0
        %988 = vmatprep.subr.bf16.mxu0 0
        %989 = vmatpush1.bf16.msra.mxu0 0
        %990 = vmatprep.mubr.bf16.mxu0 0
        %991 = vmatmul.mubr.bf16.gmra.mrb[0].mxu0 %v956
        %v992 = vpop.f32.mrb[0].mxu0
        %v993 = vadd.f32 0.0, %v992
        %v994 = vpop.f32.mrb[0].mxu0
        %v995 = vpop.f32.mrb[0].mxu0
        %v996 = vadd.f32 0.0, %v995
        %v997 = vpop.f32.mrb[0].mxu0
        %998 = vdwg.mxu0
        %s999 = scalar_lea.vmem %s7, 8
        %v1000 = vld [vmem:[%s999] sm:$0xf]
        %v1001 = vld [vmem:[%s999 + $0x4] sm:$0xf]
        %v1004 = vunpack.c.l.b16 %v1000
        %v1005 = vunpack.c.l.b16 %v1001
        %v1006 = vpack.c.b16 %v1005, %v1004
        %1008 = vmatprep.subr.bf16.mxu0 0
        %1009 = vmatpush1.bf16.msra.mxu0 %v1006
        %1010 = vmatprep.subr.bf16.mxu0 0
        %1011 = vmatpush1.bf16.msra.mxu0 0
        %1012 = vmatprep.subr.bf16.mxu0 0
        %1013 = vmatpush1.bf16.msra.mxu0 0
        %1014 = vmatprep.subr.bf16.mxu0 0
        %1015 = vmatpush1.bf16.msra.mxu0 0
        %1016 = vmatprep.subr.bf16.mxu0 0
        %1017 = vmatpush1.bf16.msra.mxu0 0
        %1018 = vmatprep.subr.bf16.mxu0 0
        %1019 = vmatpush1.bf16.msra.mxu0 0
        %1020 = vmatprep.subr.bf16.mxu0 0
        %1021 = vmatpush1.bf16.msra.mxu0 0
        %1022 = vmatprep.subr.bf16.mxu0 0
        %1023 = vmatpush1.bf16.msra.mxu0 0
        %1024 = vmatprep.subr.bf16.mxu0 0
        %1025 = vmatpush1.bf16.msra.mxu0 0
        %1026 = vmatprep.subr.bf16.mxu0 0
        %1027 = vmatpush1.bf16.msra.mxu0 0
        %1028 = vmatprep.subr.bf16.mxu0 0
        %1029 = vmatpush1.bf16.msra.mxu0 0
        %1030 = vmatprep.subr.bf16.mxu0 0
        %1031 = vmatpush1.bf16.msra.mxu0 0
        %1032 = vmatprep.subr.bf16.mxu0 0
        %1033 = vmatpush1.bf16.msra.mxu0 0
        %1034 = vmatprep.subr.bf16.mxu0 0
        %1035 = vmatpush1.bf16.msra.mxu0 0
        %1036 = vmatprep.subr.bf16.mxu0 0
        %1037 = vmatpush1.bf16.msra.mxu0 0
        %1038 = vmatprep.subr.bf16.mxu0 0
        %1039 = vmatpush1.bf16.msra.mxu0 0
        %1040 = vmatprep.mubr.bf16.mxu0 0
        %1041 = vmatmul.mubr.bf16.gmra.mrb[0].mxu0 %v956
        %v1042 = vpop.f32.mrb[0].mxu0
        %v1043 = vadd.f32 0.0, %v1042
        %v1044 = vpop.f32.mrb[0].mxu0
        %v1045 = vpop.f32.mrb[0].mxu0
        %v1046 = vadd.f32 0.0, %v1045
        %v1047 = vpop.f32.mrb[0].mxu0
        %1048 = vdwg.mxu0
        %s1049 = scalar_lea.vmem %s7, 16
        %v1050 = vld [vmem:[%s1049] sm:$0xf]
        %v1051 = vld [vmem:[%s1049 + $0x4] sm:$0xf]
        %v1054 = vunpack.c.l.b16 %v1050
        %v1055 = vunpack.c.l.b16 %v1051
        %v1056 = vpack.c.b16 %v1055, %v1054
        %1058 = vmatprep.subr.bf16.mxu0 0
        %1059 = vmatpush1.bf16.msra.mxu0 %v1056
        %1060 = vmatprep.subr.bf16.mxu0 0
        %1061 = vmatpush1.bf16.msra.mxu0 0
        %1062 = vmatprep.subr.bf16.mxu0 0
        %1063 = vmatpush1.bf16.msra.mxu0 0
        %1064 = vmatprep.subr.bf16.mxu0 0
        %1065 = vmatpush1.bf16.msra.mxu0 0
        %1066 = vmatprep.subr.bf16.mxu0 0
        %1067 = vmatpush1.bf16.msra.mxu0 0
        %1068 = vmatprep.subr.bf16.mxu0 0
        %1069 = vmatpush1.bf16.msra.mxu0 0
        %1070 = vmatprep.subr.bf16.mxu0 0
        %1071 = vmatpush1.bf16.msra.mxu0 0
        %1072 = vmatprep.subr.bf16.mxu0 0
        %1073 = vmatpush1.bf16.msra.mxu0 0
        %1074 = vmatprep.subr.bf16.mxu0 0
        %1075 = vmatpush1.bf16.msra.mxu0 0
        %1076 = vmatprep.subr.bf16.mxu0 0
        %1077 = vmatpush1.bf16.msra.mxu0 0
        %1078 = vmatprep.subr.bf16.mxu0 0
        %1079 = vmatpush1.bf16.msra.mxu0 0
        %1080 = vmatprep.subr.bf16.mxu0 0
        %1081 = vmatpush1.bf16.msra.mxu0 0
        %1082 = vmatprep.subr.bf16.mxu0 0
        %1083 = vmatpush1.bf16.msra.mxu0 0
        %1084 = vmatprep.subr.bf16.mxu0 0
        %1085 = vmatpush1.bf16.msra.mxu0 0
        %1086 = vmatprep.subr.bf16.mxu0 0
        %1087 = vmatpush1.bf16.msra.mxu0 0
        %1088 = vmatprep.subr.bf16.mxu0 0
        %1089 = vmatpush1.bf16.msra.mxu0 0
        %1090 = vmatprep.mubr.bf16.mxu0 0
        %1091 = vmatmul.mubr.bf16.gmra.mrb[0].mxu0 %v956
        %v1092 = vpop.f32.mrb[0].mxu0
        %v1093 = vadd.f32 0.0, %v1092
        %v1094 = vpop.f32.mrb[0].mxu0
        %v1095 = vpop.f32.mrb[0].mxu0
        %v1096 = vadd.f32 0.0, %v1095
        %v1097 = vpop.f32.mrb[0].mxu0
        %1098 = vdwg.mxu0
        %s1099 = scalar_lea.vmem %s7, 24
        %v1100 = vld [vmem:[%s1099] sm:$0xf]
        %v1101 = vld [vmem:[%s1099 + $0x4] sm:$0xf]
        %v1104 = vunpack.c.l.b16 %v1100
        %v1105 = vunpack.c.l.b16 %v1101
        %v1106 = vpack.c.b16 %v1105, %v1104
        %1108 = vmatprep.subr.bf16.mxu0 0
        %1109 = vmatpush1.bf16.msra.mxu0 %v1106
        %1110 = vmatprep.subr.bf16.mxu0 0
        %1111 = vmatpush1.bf16.msra.mxu0 0
        %1112 = vmatprep.subr.bf16.mxu0 0
        %1113 = vmatpush1.bf16.msra.mxu0 0
        %1114 = vmatprep.subr.bf16.mxu0 0
        %1115 = vmatpush1.bf16.msra.mxu0 0
        %1116 = vmatprep.subr.bf16.mxu0 0
        %1117 = vmatpush1.bf16.msra.mxu0 0
        %1118 = vmatprep.subr.bf16.mxu0 0
        %1119 = vmatpush1.bf16.msra.mxu0 0
        %1120 = vmatprep.subr.bf16.mxu0 0
        %1121 = vmatpush1.bf16.msra.mxu0 0
        %1122 = vmatprep.subr.bf16.mxu0 0
        %1123 = vmatpush1.bf16.msra.mxu0 0
        %1124 = vmatprep.subr.bf16.mxu0 0
        %1125 = vmatpush1.bf16.msra.mxu0 0
        %1126 = vmatprep.subr.bf16.mxu0 0
        %1127 = vmatpush1.bf16.msra.mxu0 0
        %1128 = vmatprep.subr.bf16.mxu0 0
        %1129 = vmatpush1.bf16.msra.mxu0 0
        %1130 = vmatprep.subr.bf16.mxu0 0
        %1131 = vmatpush1.bf16.msra.mxu0 0
        %1132 = vmatprep.subr.bf16.mxu0 0
        %1133 = vmatpush1.bf16.msra.mxu0 0
        %1134 = vmatprep.subr.bf16.mxu0 0
        %1135 = vmatpush1.bf16.msra.mxu0 0
        %1136 = vmatprep.subr.bf16.mxu0 0
        %1137 = vmatpush1.bf16.msra.mxu0 0
        %1138 = vmatprep.subr.bf16.mxu0 0
        %1139 = vmatpush1.bf16.msra.mxu0 0
        %1140 = vmatprep.mubr.bf16.mxu0 0
        %1141 = vmatmul.mubr.bf16.gmra.mrb[0].mxu0 %v956
        %v1142 = vpop.f32.mrb[0].mxu0
        %v1143 = vadd.f32 0.0, %v1142
        %v1144 = vpop.f32.mrb[0].mxu0
        %v1145 = vpop.f32.mrb[0].mxu0
        %v1146 = vadd.f32 0.0, %v1145
        %v1147 = vpop.f32.mrb[0].mxu0
        %1148 = vdwg.mxu0
        %v1149 = vld [vmem:[%s8] sm:$0x1]
        %v1150 = vld [vmem:[%s8 + $0x1] sm:$0x1]
        %v1151 = vld [vmem:[%s8 + $0x2] sm:$0x1]
        %v1152 = vld [vmem:[%s8 + $0x3] sm:$0x1]
        %v1157 = vlaneseq
        %v1158 = vshrl.u32 %v1157, 7
        %v1159 = vsub.s32 0, %v1158
        %v1160 = vrot.slane %v1149, %v1159
        %v1161 = vlaneseq
        %v1162 = vshrl.u32 %v1161, 7
        %v1163 = vsub.s32 0, %v1162
        %v1164 = vrot.slane %v1150, %v1163
        %v1165 = vlaneseq
        %v1166 = vshrl.u32 %v1165, 7
        %v1167 = vsub.s32 0, %v1166
        %v1168 = vrot.slane %v1151, %v1167
        %v1169 = vlaneseq
        %v1170 = vshrl.u32 %v1169, 7
        %v1171 = vsub.s32 0, %v1170
        %v1172 = vrot.slane %v1152, %v1171
        %v1177 = vadd.f32 %v993, %v1160
        %v1178 = vadd.f32 %v996, %v1160
        %v1179 = vadd.f32 %v1043, %v1164
        %v1180 = vadd.f32 %v1046, %v1164
        %v1181 = vadd.f32 %v1093, %v1168
        %v1182 = vadd.f32 %v1096, %v1168
        %v1183 = vadd.f32 %v1143, %v1172
        %v1184 = vadd.f32 %v1146, %v1172
        %v1185 = vpack.c.bf16 %v1178, %v1177
        %v1186 = vpack.c.bf16 %v1180, %v1179
        %v1187 = vpack.c.bf16 %v1182, %v1181
        %v1188 = vpack.c.bf16 %v1184, %v1183
        %v1193 = vunpack.c.l.b16 %v691
        %v1194 = vunpack.c.h.b16 %v691
        %v1195 = vunpack.c.l.b16 %v692
        %v1196 = vunpack.c.h.b16 %v692
        %v1197 = vunpack.c.l.b16 %v693
        %v1198 = vunpack.c.h.b16 %v693
        %v1199 = vunpack.c.l.b16 %v694
        %v1200 = vunpack.c.h.b16 %v694
        %v1201 = vpack.c.b16 %v1193, %v1193
        %v1202 = vpack.c.b16 %v1194, %v1194
        %v1203 = vpack.c.b16 %v1195, %v1195
        %v1204 = vpack.c.b16 %v1196, %v1196
        %v1205 = vpack.c.b16 %v1197, %v1197
        %v1206 = vpack.c.b16 %v1198, %v1198
        %v1207 = vpack.c.b16 %v1199, %v1199
        %v1208 = vpack.c.b16 %v1200, %v1200
        %v1213 = vunpack.c.l.b16 %v938
        %v1214 = vunpack.c.h.b16 %v938
        %v1215 = vunpack.c.l.b16 %v939
        %v1216 = vunpack.c.h.b16 %v939
        %v1217 = vunpack.c.l.b16 %v940
        %v1218 = vunpack.c.h.b16 %v940
        %v1219 = vunpack.c.l.b16 %v941
        %v1220 = vunpack.c.h.b16 %v941
        %v1221 = vpack.c.b16 %v1213, %v1213
        %v1222 = vpack.c.b16 %v1214, %v1214
        %v1223 = vpack.c.b16 %v1215, %v1215
        %v1224 = vpack.c.b16 %v1216, %v1216
        %v1225 = vpack.c.b16 %v1217, %v1217
        %v1226 = vpack.c.b16 %v1218, %v1218
        %v1227 = vpack.c.b16 %v1219, %v1219
        %v1228 = vpack.c.b16 %v1220, %v1220
        %v1233 = vunpack.c.l.b16 %v1185
        %v1234 = vunpack.c.h.b16 %v1185
        %v1235 = vunpack.c.l.b16 %v1186
        %v1236 = vunpack.c.h.b16 %v1186
        %v1237 = vunpack.c.l.b16 %v1187
        %v1238 = vunpack.c.h.b16 %v1187
        %v1239 = vunpack.c.l.b16 %v1188
        %v1240 = vunpack.c.h.b16 %v1188
        %v1241 = vpack.c.b16 %v1233, %v1233
        %v1242 = vpack.c.b16 %v1234, %v1234
        %v1243 = vpack.c.b16 %v1235, %v1235
        %v1244 = vpack.c.b16 %v1236, %v1236
        %v1245 = vpack.c.b16 %v1237, %v1237
        %v1246 = vpack.c.b16 %v1238, %v1238
        %v1247 = vpack.c.b16 %v1239, %v1239
        %v1248 = vpack.c.b16 %v1240, %v1240
        %vm1249 = vcmask 64512
        %v1251 = vsel %vm1249, %v1201, 0
        %v1254 = vsel %vm1249, %v1221, 0
        %1256 = vmatprep.subr.bf16.mxu0 0
        %1257 = vmatpush1.bf16.xpose.msra.mxu0 %v1254
        %1258 = vmatprep.subr.bf16.mxu0 0
        %1259 = vmatpush1.bf16.xpose.msra.mxu0 0
        %1260 = vmatprep.subr.bf16.mxu0 0
        %1261 = vmatpush1.bf16.xpose.msra.mxu0 0
        %1262 = vmatprep.subr.bf16.mxu0 0
        %1263 = vmatpush1.bf16.xpose.msra.mxu0 0
        %1264 = vmatprep.subr.bf16.mxu0 0
        %1265 = vmatpush1.bf16.xpose.msra.mxu0 0
        %1266 = vmatprep.subr.bf16.mxu0 0
        %1267 = vmatpush1.bf16.xpose.msra.mxu0 0
        %1268 = vmatprep.subr.bf16.mxu0 0
        %1269 = vmatpush1.bf16.xpose.msra.mxu0 0
        %1270 = vmatprep.subr.bf16.mxu0 0
        %1271 = vmatpush1.bf16.xpose.msra.mxu0 0
        %1272 = vmatprep.subr.bf16.mxu0 0
        %1273 = vmatpush1.bf16.xpose.msra.mxu0 0
        %1274 = vmatprep.subr.bf16.mxu0 0
        %1275 = vmatpush1.bf16.xpose.msra.mxu0 0
        %1276 = vmatprep.subr.bf16.mxu0 0
        %1277 = vmatpush1.bf16.xpose.msra.mxu0 0
        %1278 = vmatprep.subr.bf16.mxu0 0
        %1279 = vmatpush1.bf16.xpose.msra.mxu0 0
        %1280 = vmatprep.subr.bf16.mxu0 0
        %1281 = vmatpush1.bf16.xpose.msra.mxu0 0
        %1282 = vmatprep.subr.bf16.mxu0 0
        %1283 = vmatpush1.bf16.xpose.msra.mxu0 0
        %1284 = vmatprep.subr.bf16.mxu0 0
        %1285 = vmatpush1.bf16.xpose.msra.mxu0 0
        %1286 = vmatprep.subr.bf16.mxu0 0
        %1287 = vmatpush1.bf16.xpose.msra.mxu0 0
        %1288 = vmatprep.mubr.bf16.mxu0 0
        %1289 = vmatmul.mubr.bf16.gmra.mrb[0].mxu0 %v1251
        %v1290 = vpop.f32.mrb[0].mxu0
        %v1291 = vadd.f32 0.0, %v1290
        %v1292 = vpop.f32.mrb[0].mxu0
        %v1293 = vpop.f32.mrb[0].mxu0
        %v1294 = vpop.f32.mrb[0].mxu0
        %1295 = vdwg.mxu0
        %v1297 = vsel %vm1249, %v1202, 0
        %v1300 = vsel %vm1249, %v1222, 0
        %1302 = vmatprep.subr.bf16.mxu0 0
        %1303 = vmatpush1.bf16.xpose.msra.mxu0 %v1300
        %1304 = vmatprep.subr.bf16.mxu0 0
        %1305 = vmatpush1.bf16.xpose.msra.mxu0 0
        %1306 = vmatprep.subr.bf16.mxu0 0
        %1307 = vmatpush1.bf16.xpose.msra.mxu0 0
        %1308 = vmatprep.subr.bf16.mxu0 0
        %1309 = vmatpush1.bf16.xpose.msra.mxu0 0
        %1310 = vmatprep.subr.bf16.mxu0 0
        %1311 = vmatpush1.bf16.xpose.msra.mxu0 0
        %1312 = vmatprep.subr.bf16.mxu0 0
        %1313 = vmatpush1.bf16.xpose.msra.mxu0 0
        %1314 = vmatprep.subr.bf16.mxu0 0
        %1315 = vmatpush1.bf16.xpose.msra.mxu0 0
        %1316 = vmatprep.subr.bf16.mxu0 0
        %1317 = vmatpush1.bf16.xpose.msra.mxu0 0
        %1318 = vmatprep.subr.bf16.mxu0 0
        %1319 = vmatpush1.bf16.xpose.msra.mxu0 0
        %1320 = vmatprep.subr.bf16.mxu0 0
        %1321 = vmatpush1.bf16.xpose.msra.mxu0 0
        %1322 = vmatprep.subr.bf16.mxu0 0
        %1323 = vmatpush1.bf16.xpose.msra.mxu0 0
        %1324 = vmatprep.subr.bf16.mxu0 0
        %1325 = vmatpush1.bf16.xpose.msra.mxu0 0
        %1326 = vmatprep.subr.bf16.mxu0 0
        %1327 = vmatpush1.bf16.xpose.msra.mxu0 0
        %1328 = vmatprep.subr.bf16.mxu0 0
        %1329 = vmatpush1.bf16.xpose.msra.mxu0 0
        %1330 = vmatprep.subr.bf16.mxu0 0
        %1331 = vmatpush1.bf16.xpose.msra.mxu0 0
        %1332 = vmatprep.subr.bf16.mxu0 0
        %1333 = vmatpush1.bf16.xpose.msra.mxu0 0
        %1334 = vmatprep.mubr.bf16.mxu0 0
        %1335 = vmatmul.mubr.bf16.gmra.mrb[0].mxu0 %v1297
        %v1336 = vpop.f32.mrb[0].mxu0
        %v1337 = vadd.f32 0.0, %v1336
        %v1338 = vpop.f32.mrb[0].mxu0
        %v1339 = vpop.f32.mrb[0].mxu0
        %v1340 = vpop.f32.mrb[0].mxu0
        %1341 = vdwg.mxu0
        %v1343 = vsel %vm1249, %v1203, 0
        %v1346 = vsel %vm1249, %v1223, 0
        %1348 = vmatprep.subr.bf16.mxu0 0
        %1349 = vmatpush1.bf16.xpose.msra.mxu0 %v1346
        %1350 = vmatprep.subr.bf16.mxu0 0
        %1351 = vmatpush1.bf16.xpose.msra.mxu0 0
        %1352 = vmatprep.subr.bf16.mxu0 0
        %1353 = vmatpush1.bf16.xpose.msra.mxu0 0
        %1354 = vmatprep.subr.bf16.mxu0 0
        %1355 = vmatpush1.bf16.xpose.msra.mxu0 0
        %1356 = vmatprep.subr.bf16.mxu0 0
        %1357 = vmatpush1.bf16.xpose.msra.mxu0 0
        %1358 = vmatprep.subr.bf16.mxu0 0
        %1359 = vmatpush1.bf16.xpose.msra.mxu0 0
        %1360 = vmatprep.subr.bf16.mxu0 0
        %1361 = vmatpush1.bf16.xpose.msra.mxu0 0
        %1362 = vmatprep.subr.bf16.mxu0 0
        %1363 = vmatpush1.bf16.xpose.msra.mxu0 0
        %1364 = vmatprep.subr.bf16.mxu0 0
        %1365 = vmatpush1.bf16.xpose.msra.mxu0 0
        %1366 = vmatprep.subr.bf16.mxu0 0
        %1367 = vmatpush1.bf16.xpose.msra.mxu0 0
        %1368 = vmatprep.subr.bf16.mxu0 0
        %1369 = vmatpush1.bf16.xpose.msra.mxu0 0
        %1370 = vmatprep.subr.bf16.mxu0 0
        %1371 = vmatpush1.bf16.xpose.msra.mxu0 0
        %1372 = vmatprep.subr.bf16.mxu0 0
        %1373 = vmatpush1.bf16.xpose.msra.mxu0 0
        %1374 = vmatprep.subr.bf16.mxu0 0
        %1375 = vmatpush1.bf16.xpose.msra.mxu0 0
        %1376 = vmatprep.subr.bf16.mxu0 0
        %1377 = vmatpush1.bf16.xpose.msra.mxu0 0
        %1378 = vmatprep.subr.bf16.mxu0 0
        %1379 = vmatpush1.bf16.xpose.msra.mxu0 0
        %1380 = vmatprep.mubr.bf16.mxu0 0
        %1381 = vmatmul.mubr.bf16.gmra.mrb[0].mxu0 %v1343
        %v1382 = vpop.f32.mrb[0].mxu0
        %v1383 = vadd.f32 0.0, %v1382
        %v1384 = vpop.f32.mrb[0].mxu0
        %v1385 = vpop.f32.mrb[0].mxu0
        %v1386 = vpop.f32.mrb[0].mxu0
        %1387 = vdwg.mxu0
        %v1389 = vsel %vm1249, %v1204, 0
        %v1392 = vsel %vm1249, %v1224, 0
        %1394 = vmatprep.subr.bf16.mxu0 0
        %1395 = vmatpush1.bf16.xpose.msra.mxu0 %v1392
        %1396 = vmatprep.subr.bf16.mxu0 0
        %1397 = vmatpush1.bf16.xpose.msra.mxu0 0
        %1398 = vmatprep.subr.bf16.mxu0 0
        %1399 = vmatpush1.bf16.xpose.msra.mxu0 0
        %1400 = vmatprep.subr.bf16.mxu0 0
        %1401 = vmatpush1.bf16.xpose.msra.mxu0 0
        %1402 = vmatprep.subr.bf16.mxu0 0
        %1403 = vmatpush1.bf16.xpose.msra.mxu0 0
        %1404 = vmatprep.subr.bf16.mxu0 0
        %1405 = vmatpush1.bf16.xpose.msra.mxu0 0
        %1406 = vmatprep.subr.bf16.mxu0 0
        %1407 = vmatpush1.bf16.xpose.msra.mxu0 0
        %1408 = vmatprep.subr.bf16.mxu0 0
        %1409 = vmatpush1.bf16.xpose.msra.mxu0 0
        %1410 = vmatprep.subr.bf16.mxu0 0
        %1411 = vmatpush1.bf16.xpose.msra.mxu0 0
        %1412 = vmatprep.subr.bf16.mxu0 0
        %1413 = vmatpush1.bf16.xpose.msra.mxu0 0
        %1414 = vmatprep.subr.bf16.mxu0 0
        %1415 = vmatpush1.bf16.xpose.msra.mxu0 0
        %1416 = vmatprep.subr.bf16.mxu0 0
        %1417 = vmatpush1.bf16.xpose.msra.mxu0 0
        %1418 = vmatprep.subr.bf16.mxu0 0
        %1419 = vmatpush1.bf16.xpose.msra.mxu0 0
        %1420 = vmatprep.subr.bf16.mxu0 0
        %1421 = vmatpush1.bf16.xpose.msra.mxu0 0
        %1422 = vmatprep.subr.bf16.mxu0 0
        %1423 = vmatpush1.bf16.xpose.msra.mxu0 0
        %1424 = vmatprep.subr.bf16.mxu0 0
        %1425 = vmatpush1.bf16.xpose.msra.mxu0 0
        %1426 = vmatprep.mubr.bf16.mxu0 0
        %1427 = vmatmul.mubr.bf16.gmra.mrb[0].mxu0 %v1389
        %v1428 = vpop.f32.mrb[0].mxu0
        %v1429 = vadd.f32 0.0, %v1428
        %v1430 = vpop.f32.mrb[0].mxu0
        %v1431 = vpop.f32.mrb[0].mxu0
        %v1432 = vpop.f32.mrb[0].mxu0
        %1433 = vdwg.mxu0
        %v1435 = vsel %vm1249, %v1205, 0
        %v1438 = vsel %vm1249, %v1225, 0
        %1440 = vmatprep.subr.bf16.mxu0 0
        %1441 = vmatpush1.bf16.xpose.msra.mxu0 %v1438
        %1442 = vmatprep.subr.bf16.mxu0 0
        %1443 = vmatpush1.bf16.xpose.msra.mxu0 0
        %1444 = vmatprep.subr.bf16.mxu0 0
        %1445 = vmatpush1.bf16.xpose.msra.mxu0 0
        %1446 = vmatprep.subr.bf16.mxu0 0
        %1447 = vmatpush1.bf16.xpose.msra.mxu0 0
        %1448 = vmatprep.subr.bf16.mxu0 0
        %1449 = vmatpush1.bf16.xpose.msra.mxu0 0
        %1450 = vmatprep.subr.bf16.mxu0 0
        %1451 = vmatpush1.bf16.xpose.msra.mxu0 0
        %1452 = vmatprep.subr.bf16.mxu0 0
        %1453 = vmatpush1.bf16.xpose.msra.mxu0 0
        %1454 = vmatprep.subr.bf16.mxu0 0
        %1455 = vmatpush1.bf16.xpose.msra.mxu0 0
        %1456 = vmatprep.subr.bf16.mxu0 0
        %1457 = vmatpush1.bf16.xpose.msra.mxu0 0
        %1458 = vmatprep.subr.bf16.mxu0 0
        %1459 = vmatpush1.bf16.xpose.msra.mxu0 0
        %1460 = vmatprep.subr.bf16.mxu0 0
        %1461 = vmatpush1.bf16.xpose.msra.mxu0 0
        %1462 = vmatprep.subr.bf16.mxu0 0
        %1463 = vmatpush1.bf16.xpose.msra.mxu0 0
        %1464 = vmatprep.subr.bf16.mxu0 0
        %1465 = vmatpush1.bf16.xpose.msra.mxu0 0
        %1466 = vmatprep.subr.bf16.mxu0 0
        %1467 = vmatpush1.bf16.xpose.msra.mxu0 0
        %1468 = vmatprep.subr.bf16.mxu0 0
        %1469 = vmatpush1.bf16.xpose.msra.mxu0 0
        %1470 = vmatprep.subr.bf16.mxu0 0
        %1471 = vmatpush1.bf16.xpose.msra.mxu0 0
        %1472 = vmatprep.mubr.bf16.mxu0 0
        %1473 = vmatmul.mubr.bf16.gmra.mrb[0].mxu0 %v1435
        %v1474 = vpop.f32.mrb[0].mxu0
        %v1475 = vadd.f32 0.0, %v1474
        %v1476 = vpop.f32.mrb[0].mxu0
        %v1477 = vpop.f32.mrb[0].mxu0
        %v1478 = vpop.f32.mrb[0].mxu0
        %1479 = vdwg.mxu0
        %v1481 = vsel %vm1249, %v1206, 0
        %v1484 = vsel %vm1249, %v1226, 0
        %1486 = vmatprep.subr.bf16.mxu0 0
        %1487 = vmatpush1.bf16.xpose.msra.mxu0 %v1484
        %1488 = vmatprep.subr.bf16.mxu0 0
        %1489 = vmatpush1.bf16.xpose.msra.mxu0 0
        %1490 = vmatprep.subr.bf16.mxu0 0
        %1491 = vmatpush1.bf16.xpose.msra.mxu0 0
        %1492 = vmatprep.subr.bf16.mxu0 0
        %1493 = vmatpush1.bf16.xpose.msra.mxu0 0
        %1494 = vmatprep.subr.bf16.mxu0 0
        %1495 = vmatpush1.bf16.xpose.msra.mxu0 0
        %1496 = vmatprep.subr.bf16.mxu0 0
        %1497 = vmatpush1.bf16.xpose.msra.mxu0 0
        %1498 = vmatprep.subr.bf16.mxu0 0
        %1499 = vmatpush1.bf16.xpose.msra.mxu0 0
        %1500 = vmatprep.subr.bf16.mxu0 0
        %1501 = vmatpush1.bf16.xpose.msra.mxu0 0
        %1502 = vmatprep.subr.bf16.mxu0 0
        %1503 = vmatpush1.bf16.xpose.msra.mxu0 0
        %1504 = vmatprep.subr.bf16.mxu0 0
        %1505 = vmatpush1.bf16.xpose.msra.mxu0 0
        %1506 = vmatprep.subr.bf16.mxu0 0
        %1507 = vmatpush1.bf16.xpose.msra.mxu0 0
        %1508 = vmatprep.subr.bf16.mxu0 0
        %1509 = vmatpush1.bf16.xpose.msra.mxu0 0
        %1510 = vmatprep.subr.bf16.mxu0 0
        %1511 = vmatpush1.bf16.xpose.msra.mxu0 0
        %1512 = vmatprep.subr.bf16.mxu0 0
        %1513 = vmatpush1.bf16.xpose.msra.mxu0 0
        %1514 = vmatprep.subr.bf16.mxu0 0
        %1515 = vmatpush1.bf16.xpose.msra.mxu0 0
        %1516 = vmatprep.subr.bf16.mxu0 0
        %1517 = vmatpush1.bf16.xpose.msra.mxu0 0
        %1518 = vmatprep.mubr.bf16.mxu0 0
        %1519 = vmatmul.mubr.bf16.gmra.mrb[0].mxu0 %v1481
        %v1520 = vpop.f32.mrb[0].mxu0
        %v1521 = vadd.f32 0.0, %v1520
        %v1522 = vpop.f32.mrb[0].mxu0
        %v1523 = vpop.f32.mrb[0].mxu0
        %v1524 = vpop.f32.mrb[0].mxu0
        %1525 = vdwg.mxu0
        %v1527 = vsel %vm1249, %v1207, 0
        %v1530 = vsel %vm1249, %v1227, 0
        %1532 = vmatprep.subr.bf16.mxu0 0
        %1533 = vmatpush1.bf16.xpose.msra.mxu0 %v1530
        %1534 = vmatprep.subr.bf16.mxu0 0
        %1535 = vmatpush1.bf16.xpose.msra.mxu0 0
        %1536 = vmatprep.subr.bf16.mxu0 0
        %1537 = vmatpush1.bf16.xpose.msra.mxu0 0
        %1538 = vmatprep.subr.bf16.mxu0 0
        %1539 = vmatpush1.bf16.xpose.msra.mxu0 0
        %1540 = vmatprep.subr.bf16.mxu0 0
        %1541 = vmatpush1.bf16.xpose.msra.mxu0 0
        %1542 = vmatprep.subr.bf16.mxu0 0
        %1543 = vmatpush1.bf16.xpose.msra.mxu0 0
        %1544 = vmatprep.subr.bf16.mxu0 0
        %1545 = vmatpush1.bf16.xpose.msra.mxu0 0
        %1546 = vmatprep.subr.bf16.mxu0 0
        %1547 = vmatpush1.bf16.xpose.msra.mxu0 0
        %1548 = vmatprep.subr.bf16.mxu0 0
        %1549 = vmatpush1.bf16.xpose.msra.mxu0 0
        %1550 = vmatprep.subr.bf16.mxu0 0
        %1551 = vmatpush1.bf16.xpose.msra.mxu0 0
        %1552 = vmatprep.subr.bf16.mxu0 0
        %1553 = vmatpush1.bf16.xpose.msra.mxu0 0
        %1554 = vmatprep.subr.bf16.mxu0 0
        %1555 = vmatpush1.bf16.xpose.msra.mxu0 0
        %1556 = vmatprep.subr.bf16.mxu0 0
        %1557 = vmatpush1.bf16.xpose.msra.mxu0 0
        %1558 = vmatprep.subr.bf16.mxu0 0
        %1559 = vmatpush1.bf16.xpose.msra.mxu0 0
        %1560 = vmatprep.subr.bf16.mxu0 0
        %1561 = vmatpush1.bf16.xpose.msra.mxu0 0
        %1562 = vmatprep.subr.bf16.mxu0 0
        %1563 = vmatpush1.bf16.xpose.msra.mxu0 0
        %1564 = vmatprep.mubr.bf16.mxu0 0
        %1565 = vmatmul.mubr.bf16.gmra.mrb[0].mxu0 %v1527
        %v1566 = vpop.f32.mrb[0].mxu0
        %v1567 = vadd.f32 0.0, %v1566
        %v1568 = vpop.f32.mrb[0].mxu0
        %v1569 = vpop.f32.mrb[0].mxu0
        %v1570 = vpop.f32.mrb[0].mxu0
        %1571 = vdwg.mxu0
        %v1573 = vsel %vm1249, %v1208, 0
        %v1576 = vsel %vm1249, %v1228, 0
        %1578 = vmatprep.subr.bf16.mxu0 0
        %1579 = vmatpush1.bf16.xpose.msra.mxu0 %v1576
        %1580 = vmatprep.subr.bf16.mxu0 0
        %1581 = vmatpush1.bf16.xpose.msra.mxu0 0
        %1582 = vmatprep.subr.bf16.mxu0 0
        %1583 = vmatpush1.bf16.xpose.msra.mxu0 0
        %1584 = vmatprep.subr.bf16.mxu0 0
        %1585 = vmatpush1.bf16.xpose.msra.mxu0 0
        %1586 = vmatprep.subr.bf16.mxu0 0
        %1587 = vmatpush1.bf16.xpose.msra.mxu0 0
        %1588 = vmatprep.subr.bf16.mxu0 0
        %1589 = vmatpush1.bf16.xpose.msra.mxu0 0
        %1590 = vmatprep.subr.bf16.mxu0 0
        %1591 = vmatpush1.bf16.xpose.msra.mxu0 0
        %1592 = vmatprep.subr.bf16.mxu0 0
        %1593 = vmatpush1.bf16.xpose.msra.mxu0 0
        %1594 = vmatprep.subr.bf16.mxu0 0
        %1595 = vmatpush1.bf16.xpose.msra.mxu0 0
        %1596 = vmatprep.subr.bf16.mxu0 0
        %1597 = vmatpush1.bf16.xpose.msra.mxu0 0
        %1598 = vmatprep.subr.bf16.mxu0 0
        %1599 = vmatpush1.bf16.xpose.msra.mxu0 0
        %1600 = vmatprep.subr.bf16.mxu0 0
        %1601 = vmatpush1.bf16.xpose.msra.mxu0 0
        %1602 = vmatprep.subr.bf16.mxu0 0
        %1603 = vmatpush1.bf16.xpose.msra.mxu0 0
        %1604 = vmatprep.subr.bf16.mxu0 0
        %1605 = vmatpush1.bf16.xpose.msra.mxu0 0
        %1606 = vmatprep.subr.bf16.mxu0 0
        %1607 = vmatpush1.bf16.xpose.msra.mxu0 0
        %1608 = vmatprep.subr.bf16.mxu0 0
        %1609 = vmatpush1.bf16.xpose.msra.mxu0 0
        %1610 = vmatprep.mubr.bf16.mxu0 0
        %1611 = vmatmul.mubr.bf16.gmra.mrb[0].mxu0 %v1573
        %v1612 = vpop.f32.mrb[0].mxu0
        %v1613 = vadd.f32 0.0, %v1612
        %v1614 = vpop.f32.mrb[0].mxu0
        %v1615 = vpop.f32.mrb[0].mxu0
        %v1616 = vpop.f32.mrb[0].mxu0
        %1617 = vdwg.mxu0
        %v1618 = vsel %vm1249, %v1291, -inf
        %1619 = vmax.xlane.f32.xlu0 %v1618
        %v1620 = vpop.xlane.xlu0 %1619
        %v1621 = vsel %vm1249, %v1337, -inf
        %1622 = vmax.xlane.f32.xlu0 %v1621
        %v1623 = vpop.xlane.xlu0 %1622
        %v1624 = vsel %vm1249, %v1383, -inf
        %1625 = vmax.xlane.f32.xlu0 %v1624
        %v1626 = vpop.xlane.xlu0 %1625
        %v1627 = vsel %vm1249, %v1429, -inf
        %1628 = vmax.xlane.f32.xlu0 %v1627
        %v1629 = vpop.xlane.xlu0 %1628
        %v1630 = vsel %vm1249, %v1475, -inf
        %1631 = vmax.xlane.f32.xlu0 %v1630
        %v1632 = vpop.xlane.xlu0 %1631
        %v1633 = vsel %vm1249, %v1521, -inf
        %1634 = vmax.xlane.f32.xlu0 %v1633
        %v1635 = vpop.xlane.xlu0 %1634
        %v1636 = vsel %vm1249, %v1567, -inf
        %1637 = vmax.xlane.f32.xlu0 %v1636
        %v1638 = vpop.xlane.xlu0 %1637
        %v1639 = vsel %vm1249, %v1613, -inf
        %1640 = vmax.xlane.f32.xlu0 %v1639
        %v1641 = vpop.xlane.xlu0 %1640
        %v1642 = vsub.f32 %v1291, %v1620
        %v1643 = vsub.f32 %v1337, %v1623
        %v1644 = vsub.f32 %v1383, %v1626
        %v1645 = vsub.f32 %v1429, %v1629
        %v1646 = vsub.f32 %v1475, %v1632
        %v1647 = vsub.f32 %v1521, %v1635
        %v1648 = vsub.f32 %v1567, %v1638
        %v1649 = vsub.f32 %v1613, %v1641
        %v1650 = vmul.f32 %v1642, 1.442695
        %v1651 = vpow.pop %v1650
        %v1652 = vmul.f32 %v1643, 1.442695
        %v1653 = vpow.pop %v1652
        %v1654 = vmul.f32 %v1644, 1.442695
        %v1655 = vpow.pop %v1654
        %v1656 = vmul.f32 %v1645, 1.442695
        %v1657 = vpow.pop %v1656
        %v1658 = vmul.f32 %v1646, 1.442695
        %v1659 = vpow.pop %v1658
        %v1660 = vmul.f32 %v1647, 1.442695
        %v1661 = vpow.pop %v1660
        %v1662 = vmul.f32 %v1648, 1.442695
        %v1663 = vpow.pop %v1662
        %v1664 = vmul.f32 %v1649, 1.442695
        %v1665 = vpow.pop %v1664
        %v1666 = vsel %vm1249, %v1651, 0.0
        %1667 = vadd.xlane.f32.xlu0 %v1666
        %v1668 = vpop.xlane.xlu0 %1667
        %v1669 = vsel %vm1249, %v1653, 0.0
        %1670 = vadd.xlane.f32.xlu0 %v1669
        %v1671 = vpop.xlane.xlu0 %1670
        %v1672 = vsel %vm1249, %v1655, 0.0
        %1673 = vadd.xlane.f32.xlu0 %v1672
        %v1674 = vpop.xlane.xlu0 %1673
        %v1675 = vsel %vm1249, %v1657, 0.0
        %1676 = vadd.xlane.f32.xlu0 %v1675
        %v1677 = vpop.xlane.xlu0 %1676
        %v1678 = vsel %vm1249, %v1659, 0.0
        %1679 = vadd.xlane.f32.xlu0 %v1678
        %v1680 = vpop.xlane.xlu0 %1679
        %v1681 = vsel %vm1249, %v1661, 0.0
        %1682 = vadd.xlane.f32.xlu0 %v1681
        %v1683 = vpop.xlane.xlu0 %1682
        %v1684 = vsel %vm1249, %v1663, 0.0
        %1685 = vadd.xlane.f32.xlu0 %v1684
        %v1686 = vpop.xlane.xlu0 %1685
        %v1687 = vsel %vm1249, %v1665, 0.0
        %1688 = vadd.xlane.f32.xlu0 %v1687
        %v1689 = vpop.xlane.xlu0 %1688
        %v1690 = vrcp.pop %v1668
        %v1691 = vrcp.pop %v1671
        %v1692 = vrcp.pop %v1674
        %v1693 = vrcp.pop %v1677
        %v1694 = vrcp.pop %v1680
        %v1695 = vrcp.pop %v1683
        %v1696 = vrcp.pop %v1686
        %v1697 = vrcp.pop %v1689
        %v1698 = vmul.f32 %v1651, %v1690
        %v1699 = vmul.f32 %v1653, %v1691
        %v1700 = vmul.f32 %v1655, %v1692
        %v1701 = vmul.f32 %v1657, %v1693
        %v1702 = vmul.f32 %v1659, %v1694
        %v1703 = vmul.f32 %v1661, %v1695
        %v1704 = vmul.f32 %v1663, %v1696
        %v1705 = vmul.f32 %v1665, %v1697
        %v1706 = vpack.c.bf16 %v1698, %v1698
        %v1707 = vpack.c.bf16 %v1699, %v1699
        %v1708 = vpack.c.bf16 %v1700, %v1700
        %v1709 = vpack.c.bf16 %v1701, %v1701
        %v1710 = vpack.c.bf16 %v1702, %v1702
        %v1711 = vpack.c.bf16 %v1703, %v1703
        %v1712 = vpack.c.bf16 %v1704, %v1704
        %v1713 = vpack.c.bf16 %v1705, %v1705
        %v1715 = vsel %vm1249, %v1706, 0
        %vm1717 = vcmask 1043456
        %v1719 = vsel %vm1717, %v1241, 0
        %1721 = vmatprep.subr.bf16.mxu0 0
        %1722 = vmatpush1.bf16.msra.mxu0 %v1719
        %1723 = vmatprep.subr.bf16.mxu0 0
        %1724 = vmatpush1.bf16.msra.mxu0 0
        %1725 = vmatprep.subr.bf16.mxu0 0
        %1726 = vmatpush1.bf16.msra.mxu0 0
        %1727 = vmatprep.subr.bf16.mxu0 0
        %1728 = vmatpush1.bf16.msra.mxu0 0
        %1729 = vmatprep.subr.bf16.mxu0 0
        %1730 = vmatpush1.bf16.msra.mxu0 0
        %1731 = vmatprep.subr.bf16.mxu0 0
        %1732 = vmatpush1.bf16.msra.mxu0 0
        %1733 = vmatprep.subr.bf16.mxu0 0
        %1734 = vmatpush1.bf16.msra.mxu0 0
        %1735 = vmatprep.subr.bf16.mxu0 0
        %1736 = vmatpush1.bf16.msra.mxu0 0
        %1737 = vmatprep.subr.bf16.mxu0 0
        %1738 = vmatpush1.bf16.msra.mxu0 0
        %1739 = vmatprep.subr.bf16.mxu0 0
        %1740 = vmatpush1.bf16.msra.mxu0 0
        %1741 = vmatprep.subr.bf16.mxu0 0
        %1742 = vmatpush1.bf16.msra.mxu0 0
        %1743 = vmatprep.subr.bf16.mxu0 0
        %1744 = vmatpush1.bf16.msra.mxu0 0
        %1745 = vmatprep.subr.bf16.mxu0 0
        %1746 = vmatpush1.bf16.msra.mxu0 0
        %1747 = vmatprep.subr.bf16.mxu0 0
        %1748 = vmatpush1.bf16.msra.mxu0 0
        %1749 = vmatprep.subr.bf16.mxu0 0
        %1750 = vmatpush1.bf16.msra.mxu0 0
        %1751 = vmatprep.subr.bf16.mxu0 0
        %1752 = vmatpush1.bf16.msra.mxu0 0
        %1753 = vmatprep.mubr.bf16.mxu0 0
        %1754 = vmatmul.mubr.bf16.gmra.mrb[0].mxu0 %v1715
        %v1755 = vpop.f32.mrb[0].mxu0
        %v1756 = vadd.f32 0.0, %v1755
        %v1757 = vpop.f32.mrb[0].mxu0
        %v1758 = vpop.f32.mrb[0].mxu0
        %v1759 = vpop.f32.mrb[0].mxu0
        %1760 = vdwg.mxu0
        %v1762 = vsel %vm1249, %v1707, 0
        %v1765 = vsel %vm1717, %v1242, 0
        %1767 = vmatprep.subr.bf16.mxu0 0
        %1768 = vmatpush1.bf16.msra.mxu0 %v1765
        %1769 = vmatprep.subr.bf16.mxu0 0
        %1770 = vmatpush1.bf16.msra.mxu0 0
        %1771 = vmatprep.subr.bf16.mxu0 0
        %1772 = vmatpush1.bf16.msra.mxu0 0
        %1773 = vmatprep.subr.bf16.mxu0 0
        %1774 = vmatpush1.bf16.msra.mxu0 0
        %1775 = vmatprep.subr.bf16.mxu0 0
        %1776 = vmatpush1.bf16.msra.mxu0 0
        %1777 = vmatprep.subr.bf16.mxu0 0
        %1778 = vmatpush1.bf16.msra.mxu0 0
        %1779 = vmatprep.subr.bf16.mxu0 0
        %1780 = vmatpush1.bf16.msra.mxu0 0
        %1781 = vmatprep.subr.bf16.mxu0 0
        %1782 = vmatpush1.bf16.msra.mxu0 0
        %1783 = vmatprep.subr.bf16.mxu0 0
        %1784 = vmatpush1.bf16.msra.mxu0 0
        %1785 = vmatprep.subr.bf16.mxu0 0
        %1786 = vmatpush1.bf16.msra.mxu0 0
        %1787 = vmatprep.subr.bf16.mxu0 0
        %1788 = vmatpush1.bf16.msra.mxu0 0
        %1789 = vmatprep.subr.bf16.mxu0 0
        %1790 = vmatpush1.bf16.msra.mxu0 0
        %1791 = vmatprep.subr.bf16.mxu0 0
        %1792 = vmatpush1.bf16.msra.mxu0 0
        %1793 = vmatprep.subr.bf16.mxu0 0
        %1794 = vmatpush1.bf16.msra.mxu0 0
        %1795 = vmatprep.subr.bf16.mxu0 0
        %1796 = vmatpush1.bf16.msra.mxu0 0
        %1797 = vmatprep.subr.bf16.mxu0 0
        %1798 = vmatpush1.bf16.msra.mxu0 0
        %1799 = vmatprep.mubr.bf16.mxu0 0
        %1800 = vmatmul.mubr.bf16.gmra.mrb[0].mxu0 %v1762
        %v1801 = vpop.f32.mrb[0].mxu0
        %v1802 = vadd.f32 0.0, %v1801
        %v1803 = vpop.f32.mrb[0].mxu0
        %v1804 = vpop.f32.mrb[0].mxu0
        %v1805 = vpop.f32.mrb[0].mxu0
        %1806 = vdwg.mxu0
        %v1808 = vsel %vm1249, %v1708, 0
        %v1811 = vsel %vm1717, %v1243, 0
        %1813 = vmatprep.subr.bf16.mxu0 0
        %1814 = vmatpush1.bf16.msra.mxu0 %v1811
        %1815 = vmatprep.subr.bf16.mxu0 0
        %1816 = vmatpush1.bf16.msra.mxu0 0
        %1817 = vmatprep.subr.bf16.mxu0 0
        %1818 = vmatpush1.bf16.msra.mxu0 0
        %1819 = vmatprep.subr.bf16.mxu0 0
        %1820 = vmatpush1.bf16.msra.mxu0 0
        %1821 = vmatprep.subr.bf16.mxu0 0
        %1822 = vmatpush1.bf16.msra.mxu0 0
        %1823 = vmatprep.subr.bf16.mxu0 0
        %1824 = vmatpush1.bf16.msra.mxu0 0
        %1825 = vmatprep.subr.bf16.mxu0 0
        %1826 = vmatpush1.bf16.msra.mxu0 0
        %1827 = vmatprep.subr.bf16.mxu0 0
        %1828 = vmatpush1.bf16.msra.mxu0 0
        %1829 = vmatprep.subr.bf16.mxu0 0
        %1830 = vmatpush1.bf16.msra.mxu0 0
        %1831 = vmatprep.subr.bf16.mxu0 0
        %1832 = vmatpush1.bf16.msra.mxu0 0
        %1833 = vmatprep.subr.bf16.mxu0 0
        %1834 = vmatpush1.bf16.msra.mxu0 0
        %1835 = vmatprep.subr.bf16.mxu0 0
        %1836 = vmatpush1.bf16.msra.mxu0 0
        %1837 = vmatprep.subr.bf16.mxu0 0
        %1838 = vmatpush1.bf16.msra.mxu0 0
        %1839 = vmatprep.subr.bf16.mxu0 0
        %1840 = vmatpush1.bf16.msra.mxu0 0
        %1841 = vmatprep.subr.bf16.mxu0 0
        %1842 = vmatpush1.bf16.msra.mxu0 0
        %1843 = vmatprep.subr.bf16.mxu0 0
        %1844 = vmatpush1.bf16.msra.mxu0 0
        %1845 = vmatprep.mubr.bf16.mxu0 0
        %1846 = vmatmul.mubr.bf16.gmra.mrb[0].mxu0 %v1808
        %v1847 = vpop.f32.mrb[0].mxu0
        %v1848 = vadd.f32 0.0, %v1847
        %v1849 = vpop.f32.mrb[0].mxu0
        %v1850 = vpop.f32.mrb[0].mxu0
        %v1851 = vpop.f32.mrb[0].mxu0
        %1852 = vdwg.mxu0
        %v1854 = vsel %vm1249, %v1709, 0
        %v1857 = vsel %vm1717, %v1244, 0
        %1859 = vmatprep.subr.bf16.mxu0 0
        %1860 = vmatpush1.bf16.msra.mxu0 %v1857
        %1861 = vmatprep.subr.bf16.mxu0 0
        %1862 = vmatpush1.bf16.msra.mxu0 0
        %1863 = vmatprep.subr.bf16.mxu0 0
        %1864 = vmatpush1.bf16.msra.mxu0 0
        %1865 = vmatprep.subr.bf16.mxu0 0
        %1866 = vmatpush1.bf16.msra.mxu0 0
        %1867 = vmatprep.subr.bf16.mxu0 0
        %1868 = vmatpush1.bf16.msra.mxu0 0
        %1869 = vmatprep.subr.bf16.mxu0 0
        %1870 = vmatpush1.bf16.msra.mxu0 0
        %1871 = vmatprep.subr.bf16.mxu0 0
        %1872 = vmatpush1.bf16.msra.mxu0 0
        %1873 = vmatprep.subr.bf16.mxu0 0
        %1874 = vmatpush1.bf16.msra.mxu0 0
        %1875 = vmatprep.subr.bf16.mxu0 0
        %1876 = vmatpush1.bf16.msra.mxu0 0
        %1877 = vmatprep.subr.bf16.mxu0 0
        %1878 = vmatpush1.bf16.msra.mxu0 0
        %1879 = vmatprep.subr.bf16.mxu0 0
        %1880 = vmatpush1.bf16.msra.mxu0 0
        %1881 = vmatprep.subr.bf16.mxu0 0
        %1882 = vmatpush1.bf16.msra.mxu0 0
        %1883 = vmatprep.subr.bf16.mxu0 0
        %1884 = vmatpush1.bf16.msra.mxu0 0
        %1885 = vmatprep.subr.bf16.mxu0 0
        %1886 = vmatpush1.bf16.msra.mxu0 0
        %1887 = vmatprep.subr.bf16.mxu0 0
        %1888 = vmatpush1.bf16.msra.mxu0 0
        %1889 = vmatprep.subr.bf16.mxu0 0
        %1890 = vmatpush1.bf16.msra.mxu0 0
        %1891 = vmatprep.mubr.bf16.mxu0 0
        %1892 = vmatmul.mubr.bf16.gmra.mrb[0].mxu0 %v1854
        %v1893 = vpop.f32.mrb[0].mxu0
        %v1894 = vadd.f32 0.0, %v1893
        %v1895 = vpop.f32.mrb[0].mxu0
        %v1896 = vpop.f32.mrb[0].mxu0
        %v1897 = vpop.f32.mrb[0].mxu0
        %1898 = vdwg.mxu0
        %v1900 = vsel %vm1249, %v1710, 0
        %v1903 = vsel %vm1717, %v1245, 0
        %1905 = vmatprep.subr.bf16.mxu0 0
        %1906 = vmatpush1.bf16.msra.mxu0 %v1903
        %1907 = vmatprep.subr.bf16.mxu0 0
        %1908 = vmatpush1.bf16.msra.mxu0 0
        %1909 = vmatprep.subr.bf16.mxu0 0
        %1910 = vmatpush1.bf16.msra.mxu0 0
        %1911 = vmatprep.subr.bf16.mxu0 0
        %1912 = vmatpush1.bf16.msra.mxu0 0
        %1913 = vmatprep.subr.bf16.mxu0 0
        %1914 = vmatpush1.bf16.msra.mxu0 0
        %1915 = vmatprep.subr.bf16.mxu0 0
        %1916 = vmatpush1.bf16.msra.mxu0 0
        %1917 = vmatprep.subr.bf16.mxu0 0
        %1918 = vmatpush1.bf16.msra.mxu0 0
        %1919 = vmatprep.subr.bf16.mxu0 0
        %1920 = vmatpush1.bf16.msra.mxu0 0
        %1921 = vmatprep.subr.bf16.mxu0 0
        %1922 = vmatpush1.bf16.msra.mxu0 0
        %1923 = vmatprep.subr.bf16.mxu0 0
        %1924 = vmatpush1.bf16.msra.mxu0 0
        %1925 = vmatprep.subr.bf16.mxu0 0
        %1926 = vmatpush1.bf16.msra.mxu0 0
        %1927 = vmatprep.subr.bf16.mxu0 0
        %1928 = vmatpush1.bf16.msra.mxu0 0
        %1929 = vmatprep.subr.bf16.mxu0 0
        %1930 = vmatpush1.bf16.msra.mxu0 0
        %1931 = vmatprep.subr.bf16.mxu0 0
        %1932 = vmatpush1.bf16.msra.mxu0 0
        %1933 = vmatprep.subr.bf16.mxu0 0
        %1934 = vmatpush1.bf16.msra.mxu0 0
        %1935 = vmatprep.subr.bf16.mxu0 0
        %1936 = vmatpush1.bf16.msra.mxu0 0
        %1937 = vmatprep.mubr.bf16.mxu0 0
        %1938 = vmatmul.mubr.bf16.gmra.mrb[0].mxu0 %v1900
        %v1939 = vpop.f32.mrb[0].mxu0
        %v1940 = vadd.f32 0.0, %v1939
        %v1941 = vpop.f32.mrb[0].mxu0
        %v1942 = vpop.f32.mrb[0].mxu0
        %v1943 = vpop.f32.mrb[0].mxu0
        %1944 = vdwg.mxu0
        %v1946 = vsel %vm1249, %v1711, 0
        %v1949 = vsel %vm1717, %v1246, 0
        %1951 = vmatprep.subr.bf16.mxu0 0
        %1952 = vmatpush1.bf16.msra.mxu0 %v1949
        %1953 = vmatprep.subr.bf16.mxu0 0
        %1954 = vmatpush1.bf16.msra.mxu0 0
        %1955 = vmatprep.subr.bf16.mxu0 0
        %1956 = vmatpush1.bf16.msra.mxu0 0
        %1957 = vmatprep.subr.bf16.mxu0 0
        %1958 = vmatpush1.bf16.msra.mxu0 0
        %1959 = vmatprep.subr.bf16.mxu0 0
        %1960 = vmatpush1.bf16.msra.mxu0 0
        %1961 = vmatprep.subr.bf16.mxu0 0
        %1962 = vmatpush1.bf16.msra.mxu0 0
        %1963 = vmatprep.subr.bf16.mxu0 0
        %1964 = vmatpush1.bf16.msra.mxu0 0
        %1965 = vmatprep.subr.bf16.mxu0 0
        %1966 = vmatpush1.bf16.msra.mxu0 0
        %1967 = vmatprep.subr.bf16.mxu0 0
        %1968 = vmatpush1.bf16.msra.mxu0 0
        %1969 = vmatprep.subr.bf16.mxu0 0
        %1970 = vmatpush1.bf16.msra.mxu0 0
        %1971 = vmatprep.subr.bf16.mxu0 0
        %1972 = vmatpush1.bf16.msra.mxu0 0
        %1973 = vmatprep.subr.bf16.mxu0 0
        %1974 = vmatpush1.bf16.msra.mxu0 0
        %1975 = vmatprep.subr.bf16.mxu0 0
        %1976 = vmatpush1.bf16.msra.mxu0 0
        %1977 = vmatprep.subr.bf16.mxu0 0
        %1978 = vmatpush1.bf16.msra.mxu0 0
        %1979 = vmatprep.subr.bf16.mxu0 0
        %1980 = vmatpush1.bf16.msra.mxu0 0
        %1981 = vmatprep.subr.bf16.mxu0 0
        %1982 = vmatpush1.bf16.msra.mxu0 0
        %1983 = vmatprep.mubr.bf16.mxu0 0
        %1984 = vmatmul.mubr.bf16.gmra.mrb[0].mxu0 %v1946
        %v1985 = vpop.f32.mrb[0].mxu0
        %v1986 = vadd.f32 0.0, %v1985
        %v1987 = vpop.f32.mrb[0].mxu0
        %v1988 = vpop.f32.mrb[0].mxu0
        %v1989 = vpop.f32.mrb[0].mxu0
        %1990 = vdwg.mxu0
        %v1992 = vsel %vm1249, %v1712, 0
        %v1995 = vsel %vm1717, %v1247, 0
        %1997 = vmatprep.subr.bf16.mxu0 0
        %1998 = vmatpush1.bf16.msra.mxu0 %v1995
        %1999 = vmatprep.subr.bf16.mxu0 0
        %2000 = vmatpush1.bf16.msra.mxu0 0
        %2001 = vmatprep.subr.bf16.mxu0 0
        %2002 = vmatpush1.bf16.msra.mxu0 0
        %2003 = vmatprep.subr.bf16.mxu0 0
        %2004 = vmatpush1.bf16.msra.mxu0 0
        %2005 = vmatprep.subr.bf16.mxu0 0
        %2006 = vmatpush1.bf16.msra.mxu0 0
        %2007 = vmatprep.subr.bf16.mxu0 0
        %2008 = vmatpush1.bf16.msra.mxu0 0
        %2009 = vmatprep.subr.bf16.mxu0 0
        %2010 = vmatpush1.bf16.msra.mxu0 0
        %2011 = vmatprep.subr.bf16.mxu0 0
        %2012 = vmatpush1.bf16.msra.mxu0 0
        %2013 = vmatprep.subr.bf16.mxu0 0
        %2014 = vmatpush1.bf16.msra.mxu0 0
        %2015 = vmatprep.subr.bf16.mxu0 0
        %2016 = vmatpush1.bf16.msra.mxu0 0
        %2017 = vmatprep.subr.bf16.mxu0 0
        %2018 = vmatpush1.bf16.msra.mxu0 0
        %2019 = vmatprep.subr.bf16.mxu0 0
        %2020 = vmatpush1.bf16.msra.mxu0 0
        %2021 = vmatprep.subr.bf16.mxu0 0
        %2022 = vmatpush1.bf16.msra.mxu0 0
        %2023 = vmatprep.subr.bf16.mxu0 0
        %2024 = vmatpush1.bf16.msra.mxu0 0
        %2025 = vmatprep.subr.bf16.mxu0 0
        %2026 = vmatpush1.bf16.msra.mxu0 0
        %2027 = vmatprep.subr.bf16.mxu0 0
        %2028 = vmatpush1.bf16.msra.mxu0 0
        %2029 = vmatprep.mubr.bf16.mxu0 0
        %2030 = vmatmul.mubr.bf16.gmra.mrb[0].mxu0 %v1992
        %v2031 = vpop.f32.mrb[0].mxu0
        %v2032 = vadd.f32 0.0, %v2031
        %v2033 = vpop.f32.mrb[0].mxu0
        %v2034 = vpop.f32.mrb[0].mxu0
        %v2035 = vpop.f32.mrb[0].mxu0
        %2036 = vdwg.mxu0
        %v2038 = vsel %vm1249, %v1713, 0
        %v2041 = vsel %vm1717, %v1248, 0
        %2043 = vmatprep.subr.bf16.mxu0 0
        %2044 = vmatpush1.bf16.msra.mxu0 %v2041
        %2045 = vmatprep.subr.bf16.mxu0 0
        %2046 = vmatpush1.bf16.msra.mxu0 0
        %2047 = vmatprep.subr.bf16.mxu0 0
        %2048 = vmatpush1.bf16.msra.mxu0 0
        %2049 = vmatprep.subr.bf16.mxu0 0
        %2050 = vmatpush1.bf16.msra.mxu0 0
        %2051 = vmatprep.subr.bf16.mxu0 0
        %2052 = vmatpush1.bf16.msra.mxu0 0
        %2053 = vmatprep.subr.bf16.mxu0 0
        %2054 = vmatpush1.bf16.msra.mxu0 0
        %2055 = vmatprep.subr.bf16.mxu0 0
        %2056 = vmatpush1.bf16.msra.mxu0 0
        %2057 = vmatprep.subr.bf16.mxu0 0
        %2058 = vmatpush1.bf16.msra.mxu0 0
        %2059 = vmatprep.subr.bf16.mxu0 0
        %2060 = vmatpush1.bf16.msra.mxu0 0
        %2061 = vmatprep.subr.bf16.mxu0 0
        %2062 = vmatpush1.bf16.msra.mxu0 0
        %2063 = vmatprep.subr.bf16.mxu0 0
        %2064 = vmatpush1.bf16.msra.mxu0 0
        %2065 = vmatprep.subr.bf16.mxu0 0
        %2066 = vmatpush1.bf16.msra.mxu0 0
        %2067 = vmatprep.subr.bf16.mxu0 0
        %2068 = vmatpush1.bf16.msra.mxu0 0
        %2069 = vmatprep.subr.bf16.mxu0 0
        %2070 = vmatpush1.bf16.msra.mxu0 0
        %2071 = vmatprep.subr.bf16.mxu0 0
        %2072 = vmatpush1.bf16.msra.mxu0 0
        %2073 = vmatprep.subr.bf16.mxu0 0
        %2074 = vmatpush1.bf16.msra.mxu0 0
        %2075 = vmatprep.mubr.bf16.mxu0 0
        %2076 = vmatmul.mubr.bf16.gmra.mrb[0].mxu0 %v2038
        %v2077 = vpop.f32.mrb[0].mxu0
        %v2078 = vadd.f32 0.0, %v2077
        %v2079 = vpop.f32.mrb[0].mxu0
        %v2080 = vpop.f32.mrb[0].mxu0
        %v2081 = vpop.f32.mrb[0].mxu0
        %2082 = vdwg.mxu0
        %v2083 = vpack.c.bf16 %v1756, %v1756
        %v2084 = vpack.c.bf16 %v1802, %v1802
        %v2085 = vpack.c.bf16 %v1848, %v1848
        %v2086 = vpack.c.bf16 %v1894, %v1894
        %v2087 = vpack.c.bf16 %v1940, %v1940
        %v2088 = vpack.c.bf16 %v1986, %v1986
        %v2089 = vpack.c.bf16 %v2032, %v2032
        %v2090 = vpack.c.bf16 %v2078, %v2078
        %v2093 = vunpack.c.l.b16 %v2083
        %v2094 = vunpack.c.l.b16 %v2084
        %v2095 = vpack.c.b16 %v2094, %v2093
        %v2098 = vunpack.c.l.b16 %v2085
        %v2099 = vunpack.c.l.b16 %v2086
        %v2100 = vpack.c.b16 %v2099, %v2098
        %2101 = vrot.lane.b32.xlu0 %v2100, 8
        %v2102 = vpop.permute.xlu0 %2101
        %v2105 = vunpack.c.l.b16 %v2087
        %v2106 = vunpack.c.l.b16 %v2088
        %v2107 = vpack.c.b16 %v2106, %v2105
        %2108 = vrot.lane.b32.xlu0 %v2107, 16
        %v2109 = vpop.permute.xlu0 %2108
        %v2112 = vunpack.c.l.b16 %v2089
        %v2113 = vunpack.c.l.b16 %v2090
        %v2114 = vpack.c.b16 %v2113, %v2112
        %2115 = vrot.lane.b32.xlu0 %v2114, 24
        %v2116 = vpop.permute.xlu0 %2115
        %v2119 = vsel %vm1249, %v2095, %v2102
        %v2121 = vsel %vm452, %v2119, %v2109
        %vm2122 = vcmask 195584
        %v2124 = vsel %vm2122, %v2121, %v2116
        %v2125 = vld [vmem:[%s9] sm:$0xf]
        %v2126 = vld [vmem:[%s9 + $0x4] sm:$0xf]
        %v2127 = vld [vmem:[%s9 + $0x8] sm:$0xf]
        %v2128 = vld [vmem:[%s9 + $0xc] sm:$0xf]
        %v2129 = vld [vmem:[%s10] sm:$0x1]
        %v2131 = vlaneseq
        %v2132 = vshrl.u32 %v2131, 7
        %v2133 = vsub.s32 0, %v2132
        %v2134 = vrot.slane %v2129, %v2133
        %v2140 = vunpack.c.l.b16 %v2125
        %v2141 = vunpack.c.l.b16 %v2126
        %v2142 = vunpack.c.l.b16 %v2127
        %v2143 = vunpack.c.l.b16 %v2128
        %v2144 = vpack.c.b16 %v2141, %v2140
        %v2145 = vpack.c.b16 %v2143, %v2142
        %vm2148 = vcmask 261120
        %v2149 = vsel %vm2148, %v2124, 0
        %2151 = vmatprep.subr.bf16.mxu0 0
        %2152 = vmatpush1.bf16.msra.mxu0 %v2144
        %2153 = vmatprep.subr.bf16.mxu0 0
        %2154 = vmatpush1.bf16.msra.mxu0 %v2145
        %2155 = vmatprep.subr.bf16.mxu0 0
        %2156 = vmatpush1.bf16.msra.mxu0 0
        %2157 = vmatprep.subr.bf16.mxu0 0
        %2158 = vmatpush1.bf16.msra.mxu0 0
        %2159 = vmatprep.subr.bf16.mxu0 0
        %2160 = vmatpush1.bf16.msra.mxu0 0
        %2161 = vmatprep.subr.bf16.mxu0 0
        %2162 = vmatpush1.bf16.msra.mxu0 0
        %2163 = vmatprep.subr.bf16.mxu0 0
        %2164 = vmatpush1.bf16.msra.mxu0 0
        %2165 = vmatprep.subr.bf16.mxu0 0
        %2166 = vmatpush1.bf16.msra.mxu0 0
        %2167 = vmatprep.subr.bf16.mxu0 0
        %2168 = vmatpush1.bf16.msra.mxu0 0
        %2169 = vmatprep.subr.bf16.mxu0 0
        %2170 = vmatpush1.bf16.msra.mxu0 0
        %2171 = vmatprep.subr.bf16.mxu0 0
        %2172 = vmatpush1.bf16.msra.mxu0 0
        %2173 = vmatprep.subr.bf16.mxu0 0
        %2174 = vmatpush1.bf16.msra.mxu0 0
        %2175 = vmatprep.subr.bf16.mxu0 0
        %2176 = vmatpush1.bf16.msra.mxu0 0
        %2177 = vmatprep.subr.bf16.mxu0 0
        %2178 = vmatpush1.bf16.msra.mxu0 0
        %2179 = vmatprep.subr.bf16.mxu0 0
        %2180 = vmatpush1.bf16.msra.mxu0 0
        %2181 = vmatprep.subr.bf16.mxu0 0
        %2182 = vmatpush1.bf16.msra.mxu0 0
        %2183 = vmatprep.mubr.bf16.mxu0 0
        %2184 = vmatmul.mubr.bf16.gmra.mrb[0].mxu0 %v2149
        %v2185 = vpop.f32.mrb[0].mxu0
        %v2186 = vadd.f32 %v2134, %v2185
        %v2187 = vpop.f32.mrb[0].mxu0
        %v2188 = vpop.f32.mrb[0].mxu0
        %v2189 = vadd.f32 %v2134, %v2188
        %v2190 = vpop.f32.mrb[0].mxu0
        %2191 = vdwg.mxu0
        %2192 = vst.msk [vmem:[%s412] sm:$0xff] %vm2148, %v2186
        %2193 = vst.msk [vmem:[%s412 + $0x8] sm:$0xff] %vm2148, %v2189
        %s2194 = sand.u32 %s279, 1
        %s2195 = scalar_lea.sflag [#allocation3], %s2194
        %s2196 = sand.u32 %s279, 1
        %s2197 = smul.addr %s2196, 16
        %s2198 = scalar_lea.vmem [#allocation2], %s2197
        // Predicated region
        $region65: #{tpu_custom_call.1} parent=63 // pred_check
          %p2199 = pneg %p289
        $region66: #{tpu_custom_call.1} parent=63 // pred_check_branch
          %2201 = sbr.rel (%p2199) target = $region68
        $region67: #{tpu_custom_call.1} parent=63 // pred_region
          %s2202 = smul.u32 2, %s25
          %s2204 = ssub.s32 256, 256
          %2205 = vsyncadd %s2195, %s2204
          %s2206 = smul.addr %s2202, 128
          %s2207 = scalar_lea.hbm %s11, %s2206
          %s2208 = sshll.u32 %s2198, 4
          %s2209 = int_to_ptr.vmem [resolvable:$true] %s2208
          %2214 = dma.vmem_to_hbm [thread:$0]  %s2209, 256, %s2207, %s2195, 128, 128, 8
        $region68: #{tpu_custom_call.1} parent=63 // pred_fallthru
          _
      $region64: #{tpu_custom_call.1} parent=5 // pred_fallthru
        _
      %p2215 = scmp.le.s32.totalorder 2, %s20
      // Predicated region
      $region69: #{tpu_custom_call.1} parent=5 // pred_check
        %p2216 = pneg %p2215
      $region70: #{tpu_custom_call.1} parent=5 // pred_check_branch
        %2218 = sbr.rel (%p2216) target = $region72
      $region71: #{tpu_custom_call.1} parent=5 // pred_region
        %s2219 = ssub.s32 %s20, 2
        // Predicated region
        $region73: #{tpu_custom_call.1} parent=71 // pred_check
          %p2220 = pneg %p295
        $region74: #{tpu_custom_call.1} parent=71 // pred_check_branch
          %2222 = sbr.rel (%p2220) target = $region76
        $region75: #{tpu_custom_call.1} parent=71 // pred_region
          %s2223 = sand.u32 %s280, 1
          %s2224 = scalar_lea.sflag [#allocation3], %s2223
          %s2225 = sand.u32 %s280, 1
          %s2226 = smul.addr %s2225, 16
          %s2227 = scalar_lea.vmem [#allocation2], %s2226
          %2228 = dma.done %s2224, 256
        $region76: #{tpu_custom_call.1} parent=71 // pred_fallthru
          _
      $region72: #{tpu_custom_call.1} parent=5 // pred_fallthru
        _
    $region6: #{tpu_custom_call.1} parent=1 // loop_footer
      %s24 = sadd.s32 1, %s20
    $region7: #{tpu_custom_call.1} parent=1 // loop_footer_branch
      %19 = sbr.rel target = $region3
    $region8: #{tpu_custom_call.1} parent=1 // loop_exit
      _
    %2229 = vsyncpa [#allocation3], 1
    %s2230 = scalar_lea.sflag [#allocation3], 1
    %2231 = vsyncpa %s2230, 1

</llo_original>
